<compile_context>
chip_gen: v5e
topology: v5e:2x2
jax: 0.10.0
libtpu: 0.0.40
codegen_flags: <defaults>
</compile_context>

<pallas_src>
import numpy as np
import jax
import jax.numpy as jnp
from jax.experimental import pallas as pl
from jax.experimental.pallas import tpu as pltpu


def netvlad_kernel(x_ref,      # (B, T, D)  input descriptors (batch block)
                   len_ref,    # (B, 1, 1)  int32 sequence lengths
                   w1_ref,     # (3, D)     depthwise conv taps (BN1 scale folded in)
                   t1_ref,     # (1, D)     BN1 shift
                   w2_ref,     # (D, K)     pointwise conv weight (BN2 scale folded), bf16
                   b2_ref,     # (1, K)     pointwise bias (BN2 folded)
                   c_ref,      # (K, D)     centroids
                   out_ref):   # (B, K*D)   flattened VLAD (lane-dense)
    B, T, D = x_ref.shape
    K = c_ref.shape[0]
    rows = B * T   # collapsed batch*token axis; T is padded to a multiple of 8
                   # so (B,T,.) <-> (rows,.) reshapes are layout no-ops.

    x = x_ref[...].reshape(rows, D)

    # 1) descriptor-wise L2 normalization over D (rsqrt on EUP, no divides)
    xn = x * jax.lax.rsqrt(
        jnp.maximum(jnp.sum(x * x, axis=-1, keepdims=True), 1e-24))

    # 2) depthwise 3x3 conv (W == 1 -> 1-D conv over tokens) via XLU sublane
    #    rolls; rows that wrapped across sample boundaries are zeroed, which
    #    reproduces the conv's zero padding.
    tpos = jax.lax.broadcasted_iota(jnp.int32, (B, T, 1), 1).reshape(rows, 1)
    x_prev = jnp.where(tpos == 0, 0.0, pltpu.roll(xn, shift=1, axis=0))
    x_next = jnp.where(tpos == T - 1, 0.0, pltpu.roll(xn, shift=rows - 1, axis=0))
    h1 = x_prev * w1_ref[0:1, :] + xn * w1_ref[1:2, :] + x_next * w1_ref[2:3, :]
    h1 = jnp.maximum(h1 + t1_ref[...], 0.0)            # fused BN1 (eval) + ReLU

    # 3) pointwise 1x1 conv on the MXU: (rows, D) @ (D, K), bf16 in / f32 acc
    logits = jnp.dot(h1.astype(jnp.bfloat16), w2_ref[...],
                     preferred_element_type=jnp.float32) + b2_ref[...]
    logits = jnp.maximum(logits, 0.0)                  # fused BN2 (eval) + ReLU

    # 4) 'textual' sequence mask + softmax over clusters
    lgt = logits.reshape(B, T, K)
    tio = jax.lax.broadcasted_iota(jnp.int32, (B, T, K), 1)
    lgt = jnp.where(tio < len_ref[...], lgt, jnp.float32(-1e18))
    p = jnp.exp(lgt - jnp.max(lgt, axis=-1, keepdims=True))
    sa = p * pl.reciprocal(jnp.sum(p, axis=-1, keepdims=True), approx=True)  # (B,T,K)

    # 5) VLAD aggregation + intra-normalization, produced directly in the
    #    flattened (B, K*D) lane-dense layout.  The aggregation is
    #    block-diagonal per sample (contraction dim is only T), so it runs as
    #    a per-cluster multiply + sublane reduce (VPU/XLU), vectorized over
    #    the whole batch block; sa_sum is an XLU reduce (no (T,1) MXU pass).
    xn3 = xn.reshape(B, T, D)
    sa_sum = jnp.sum(sa, axis=1)                        # (B, K)
    parts = []
    for k in range(K):                                  # static unroll over clusters
        agg_k = jnp.sum(sa[:, :, k:k + 1] * xn3, axis=1)          # (B, D)
        v_k = agg_k - sa_sum[:, k:k + 1] * c_ref[k:k + 1, :]      # (B, D)
        v_k = v_k * jax.lax.rsqrt(                                # intra-norm over D
            jnp.maximum(jnp.sum(v_k * v_k, axis=-1, keepdims=True), 1e-24))
        parts.append(v_k)
    vlad = jnp.concatenate(parts, axis=-1)              # (B, K*D)

    # 6) global L2 normalization over the flattened K*D; one dense store
    vlad = vlad * jax.lax.rsqrt(
        jnp.maximum(jnp.sum(vlad * vlad, axis=-1, keepdims=True), 1e-24))
    out_ref[...] = vlad


def netvlad_pallas(x, lengths, w1eff, s1, t1, w2T, b2, s2, t2, centroids,
                   *, block_b=None):
    bs, T, D = x.shape
    K = centroids.shape[0]

    # Fold eval-mode BatchNorm affine/stats into the conv params (exact fusion):
    #   BN1: (conv1(x))*s1 + t1 == conv1_{w*s1}(x) + t1
    #   BN2: (h1@w2T + b2)*s2 + t2 == h1@(w2T*s2) + (b2*s2 + t2)
    w1s = (w1eff * s1).astype(jnp.float32)
    w2s = (w2T * s2).astype(jnp.bfloat16)       # bf16 MXU operand, f32 accumulate
    bias2 = (b2 * s2 + t2).astype(jnp.float32)
    # TODO(synk): on v6e/v7x, x could also be passed as bf16 to halve the input
    # DMA; kept f32 here so elementwise math stays f32 on v5e and for the test.

    # Pad tokens to a multiple of 8 (sublane tile) so in-kernel (B,T,.)<->(B*T,.)
    # reshapes are layout no-ops; padded tokens are masked out by `lengths`.
    T_pad = pl.cdiv(T, 8) * 8
    if T_pad != T:
        x = jnp.pad(x, ((0, 0), (0, T_pad - T), (0, 0)))

    # Batch several samples per grid step so the collapsed (block_b*T, D)
    # pointwise matmul fills the MXU M dim and the per-step pipeline overhead
    # is amortized; keep >= 2 grid steps when that doesn't starve the MXU so
    # both v7x TensorCores get work.
    if block_b is None:
        block_b = max(1, min(bs, pl.cdiv(256, T_pad)))
        if pl.cdiv(bs, block_b) < 2 and pl.cdiv(bs, 2) * T_pad >= 256:
            block_b = pl.cdiv(bs, 2)
    if block_b < bs:
        block_b = pl.cdiv(block_b, 8) * 8   # 8-align 2nd-minor dim of the out block
    bs_pad = pl.cdiv(bs, block_b) * block_b
    if bs_pad != bs:
        x = jnp.pad(x, ((0, bs_pad - bs), (0, 0), (0, 0)))
        lengths = jnp.pad(lengths, (0, bs_pad - bs))   # length 0 -> fully masked
    len3 = lengths.astype(jnp.int32).reshape(bs_pad, 1, 1)

    grid = (bs_pad // block_b,)
    out = pl.pallas_call(
        netvlad_kernel,
        out_shape=jax.ShapeDtypeStruct((bs_pad, K * D), jnp.float32),
        grid=grid,
        in_specs=[
            pl.BlockSpec((block_b, T_pad, D), lambda b: (b, 0, 0)),  # x
            pl.BlockSpec((block_b, 1, 1), lambda b: (b, 0, 0)),      # lengths
            # Constant index maps: Pallas only re-DMAs these when the block
            # index changes, so they stream in once; the double-buffer cost is
            # a few KB at these sizes (switch to full VMEM residency for big D/K).
            pl.BlockSpec((3, D), lambda b: (0, 0)),                  # w1s
            pl.BlockSpec((1, D), lambda b: (0, 0)),                  # t1
            pl.BlockSpec((D, K), lambda b: (0, 0)),                  # w2s (bf16)
            pl.BlockSpec((1, K), lambda b: (0, 0)),                  # bias2
            pl.BlockSpec((K, D), lambda b: (0, 0)),                  # centroids
        ],
        out_specs=pl.BlockSpec((block_b, K * D), lambda b: (b, 0)),  # lane-dense
        compiler_params=pltpu.CompilerParams(
            dimension_semantics=("parallel",)),
    )(x, len3, w1s, t1, w2s, bias2, centroids)

    return out[:bs]


def netvlad_ref(x, lengths, w1eff, s1, t1, w2T, b2, s2, t2, centroids):
    """Pure-JAX reference mirroring the PyTorch forward (for verification)."""
    bs, T, D = x.shape
    nrm = jnp.sqrt(jnp.sum(x * x, axis=-1, keepdims=True))
    xn = x / jnp.maximum(nrm, 1e-12)
    x_prev = jnp.pad(xn, ((0, 0), (1, 0), (0, 0)))[:, :-1]
    x_next = jnp.pad(xn, ((0, 0), (0, 1), (0, 0)))[:, 1:]
    h1 = x_prev * w1eff[0] + xn * w1eff[1] + x_next * w1eff[2]
    h1 = jnp.maximum(h1 * s1 + t1, 0.0)
    h2 = jnp.einsum('btd,dk->btk', h1, w2T,
                    precision=jax.lax.Precision.HIGHEST) + b2
    logits = jnp.maximum(h2 * s2 + t2, 0.0)
    t_idx = jnp.arange(T)[None, :, None]
    logits = jnp.where(t_idx < lengths[:, None, None], logits, -1e18)
    sa = jax.nn.softmax(logits, axis=-1)                         # (bs, T, K)
    agg = jnp.einsum('btk,btd->bkd', sa, xn,
                     precision=jax.lax.Precision.HIGHEST)
    sa_sum = jnp.sum(sa, axis=1)                                 # (bs, K)
    vlad = agg - sa_sum[:, :, None] * centroids[None]
    vlad = vlad / jnp.maximum(
        jnp.linalg.norm(vlad, axis=-1, keepdims=True), 1e-12)
    v = vlad.reshape(bs, -1)
    v = v / jnp.maximum(jnp.linalg.norm(v, axis=-1, keepdims=True), 1e-12)
    return v


if __name__ == "__main__":
    # Small shapes consistent with the module: x_ is (bs, num_tokens, emb_dim)
    bs, T, D, K = 4, 8, 32, 16
    bn_eps = 1e-5

    key = jax.random.PRNGKey(0)
    kx, kc, kw1, kw2, kb2, kbn = jax.random.split(key, 6)

    # inputs
    x_ = jax.random.normal(kx, (bs, T, D), dtype=jnp.float32)
    lengths = jnp.array([5, 8, 3, 6], dtype=jnp.int32)

    # parameters (deterministic synthetic init; shapes follow NetVLAD.__init__)
    centroids = 0.1 * jax.random.uniform(kc, (K, D), dtype=jnp.float32)

    # Block.conv1: depthwise Conv2d(D, D, 3, padding=1, groups=D, bias=False)
    w1_full = 0.1 * jax.random.normal(kw1, (D, 1, 3, 3), dtype=jnp.float32)
    w1eff = jnp.transpose(w1_full[:, 0, :, 1])       # (3, D): only kw==1 matters (W == 1)

    # Block.conv2: pointwise Conv2d(D, K, 1, bias=True)
    w2 = jax.random.normal(kw2, (K, D), dtype=jnp.float32) / np.sqrt(D)
    b2 = 0.05 * jax.random.normal(kb2, (K,), dtype=jnp.float32)

    # BatchNorm (eval mode) params, fused to scale/shift
    kb1, kb2n, kb3, kb4 = jax.random.split(kbn, 4)
    g1 = 1.0 + 0.1 * jax.random.normal(kb1, (D,), dtype=jnp.float32)
    be1 = 0.1 * jax.random.normal(kb2n, (D,), dtype=jnp.float32)
    rm1 = 0.1 * jax.random.normal(kb3, (D,), dtype=jnp.float32)
    rv1 = jax.random.uniform(kb4, (D,), minval=0.5, maxval=1.5, dtype=jnp.float32)
    g2 = jnp.ones((K,), jnp.float32)
    be2 = jnp.zeros((K,), jnp.float32)
    rm2 = jnp.zeros((K,), jnp.float32)
    rv2 = jnp.ones((K,), jnp.float32)

    s1 = (g1 / jnp.sqrt(rv1 + bn_eps)).reshape(1, D)
    t1 = (be1 - rm1 * g1 / jnp.sqrt(rv1 + bn_eps)).reshape(1, D)
    s2 = (g2 / jnp.sqrt(rv2 + bn_eps)).reshape(1, K)
    t2 = (be2 - rm2 * g2 / jnp.sqrt(rv2 + bn_eps)).reshape(1, K)

    w2T = jnp.transpose(w2)        # (D, K)
    b2r = b2.reshape(1, K)

    # TODO(synk): self.linear (Linear(K*D, 1024)) and the attributes written by
    # _init_params are never used by forward and are omitted.

    out = netvlad_pallas(x_, lengths, w1eff, s1, t1, w2T, b2r, s2, t2, centroids)
    out = jax.block_until_ready(out)

    ref = netvlad_ref(x_, lengths, w1eff, s1, t1, w2T, b2r, s2, t2, centroids)
    np.testing.assert_allclose(np.asarray(out), np.asarray(ref),
                               atol=1e-2, rtol=1e-2)

    assert out.shape == (bs, K * D)
    print("KERNEL_OK")
</pallas_src>

<mosaic_0001>
module attributes {stable_mosaic.version = 11 : i64} {
  func.func @netvlad_kernel(%arg0: i32, %arg1: memref<4x8x32xf32, #tpu.memory_space<vmem>>, %arg2: memref<4x1x1xi32, #tpu.memory_space<vmem>>, %arg3: memref<3x32xf32, #tpu.memory_space<vmem>>, %arg4: memref<1x32xf32, #tpu.memory_space<vmem>>, %arg5: memref<32x16xbf16, #tpu.memory_space<vmem>>, %arg6: memref<1x16xf32, #tpu.memory_space<vmem>>, %arg7: memref<16x32xf32, #tpu.memory_space<vmem>>, %arg8: memref<4x512xf32, #tpu.memory_space<vmem>>) attributes {dimension_semantics = [#tpu.dimension_semantics<parallel>], iteration_bounds = array<i64: 1>, scalar_prefetch = 0 : i64, scratch_operands = 0 : i64, tpu.core_type = #tpu.core_type<tc>, window_params = [{transform_indices = @transform_0, window_bounds = array<i64: 4, 8, 32>}, {transform_indices = @transform_1, window_bounds = array<i64: 4, 1, 1>}, {pipeline_mode = #tpu.pipeline_mode<synchronous>, transform_indices = @transform_2, window_bounds = array<i64: 3, 32>}, {pipeline_mode = #tpu.pipeline_mode<synchronous>, transform_indices = @transform_3, window_bounds = array<i64: 1, 32>}, {pipeline_mode = #tpu.pipeline_mode<synchronous>, transform_indices = @transform_4, window_bounds = array<i64: 32, 16>}, {pipeline_mode = #tpu.pipeline_mode<synchronous>, transform_indices = @transform_5, window_bounds = array<i64: 1, 16>}, {pipeline_mode = #tpu.pipeline_mode<synchronous>, transform_indices = @transform_6, window_bounds = array<i64: 16, 32>}, {transform_indices = @transform_7, window_bounds = array<i64: 4, 512>}]} {
    %c0 = arith.constant 0 : index
    %c0_0 = arith.constant 0 : index
    %c0_1 = arith.constant 0 : index
    %0 = vector.load %arg1[%c0, %c0_0, %c0_1] : memref<4x8x32xf32, #tpu.memory_space<vmem>>, vector<4x8x32xf32>
    %1 = vector.shape_cast %0 : vector<4x8x32xf32> to vector<32x32xf32>
    %2 = arith.mulf %1, %1 : vector<32x32xf32>
    %cst = arith.constant dense<0.000000e+00> : vector<32xf32>
    %3 = vector.multi_reduction <add>, %2, %cst [1] : vector<32x32xf32> to vector<32xf32>
    %4 = vector.shape_cast %3 : vector<32xf32> to vector<32x1xf32>
    %cst_2 = arith.constant 1.000000e-24 : f32
    %5 = vector.broadcast %cst_2 : f32 to vector<32x1xf32>
    %6 = arith.maximumf %4, %5 : vector<32x1xf32>
    %7 = math.rsqrt %6 : vector<32x1xf32>
    %8 = vector.broadcast %7 : vector<32x1xf32> to vector<32x32xf32>
    %9 = arith.mulf %1, %8 : vector<32x32xf32>
    %10 = tpu.iota {dimensions = array<i32: 1>} : vector<4x8x1xi32>
    %11 = vector.shape_cast %10 : vector<4x8x1xi32> to vector<32x1xi32>
    %c0_i32 = arith.constant 0 : i32
    %12 = vector.broadcast %c0_i32 : i32 to vector<32x1xi32>
    %13 = arith.cmpi eq, %11, %12 : vector<32x1xi32>
    %c1_i32 = arith.constant 1 : i32
    %14 = tpu.dynamic_rotate %9 by %c1_i32 dim 0 : vector<32x32xf32>, i32 -> vector<32x32xf32>
    %cst_3 = arith.constant 0.000000e+00 : f32
    %15 = vector.shape_cast %13 : vector<32x1xi1> to vector<32x1xi1>
    %16 = vector.broadcast %15 : vector<32x1xi1> to vector<32x32xi1>
    %17 = vector.broadcast %cst_3 : f32 to vector<32x32xf32>
    %18 = arith.select %16, %17, %14 : vector<32x32xi1>, vector<32x32xf32>
    %c7_i32 = arith.constant 7 : i32
    %19 = vector.broadcast %c7_i32 : i32 to vector<32x1xi32>
    %20 = arith.cmpi eq, %11, %19 : vector<32x1xi32>
    %c31_i32 = arith.constant 31 : i32
    %21 = tpu.dynamic_rotate %9 by %c31_i32 dim 0 : vector<32x32xf32>, i32 -> vector<32x32xf32>
    %cst_4 = arith.constant 0.000000e+00 : f32
    %22 = vector.shape_cast %20 : vector<32x1xi1> to vector<32x1xi1>
    %23 = vector.broadcast %22 : vector<32x1xi1> to vector<32x32xi1>
    %24 = vector.broadcast %cst_4 : f32 to vector<32x32xf32>
    %25 = arith.select %23, %24, %21 : vector<32x32xi1>, vector<32x32xf32>
    %c0_5 = arith.constant 0 : index
    %c0_6 = arith.constant 0 : index
    %26 = vector.load %arg3[%c0_5, %c0_6] : memref<3x32xf32, #tpu.memory_space<vmem>>, vector<1x32xf32>
    %27 = vector.broadcast %26 : vector<1x32xf32> to vector<32x32xf32>
    %28 = arith.mulf %18, %27 : vector<32x32xf32>
    %c1 = arith.constant 1 : index
    %c0_7 = arith.constant 0 : index
    %29 = vector.load %arg3[%c1, %c0_7] : memref<3x32xf32, #tpu.memory_space<vmem>>, vector<1x32xf32>
    %30 = vector.broadcast %29 : vector<1x32xf32> to vector<32x32xf32>
    %31 = arith.mulf %9, %30 : vector<32x32xf32>
    %32 = arith.addf %28, %31 : vector<32x32xf32>
    %c2 = arith.constant 2 : index
    %c0_8 = arith.constant 0 : index
    %33 = vector.load %arg3[%c2, %c0_8] : memref<3x32xf32, #tpu.memory_space<vmem>>, vector<1x32xf32>
    %34 = vector.broadcast %33 : vector<1x32xf32> to vector<32x32xf32>
    %35 = arith.mulf %25, %34 : vector<32x32xf32>
    %36 = arith.addf %32, %35 : vector<32x32xf32>
    %c0_9 = arith.constant 0 : index
    %c0_10 = arith.constant 0 : index
    %37 = vector.load %arg4[%c0_9, %c0_10] : memref<1x32xf32, #tpu.memory_space<vmem>>, vector<1x32xf32>
    %38 = vector.broadcast %37 : vector<1x32xf32> to vector<32x32xf32>
    %39 = arith.addf %36, %38 : vector<32x32xf32>
    %cst_11 = arith.constant 0.000000e+00 : f32
    %40 = vector.broadcast %cst_11 : f32 to vector<32x32xf32>
    %41 = arith.maximumf %39, %40 : vector<32x32xf32>
    %42 = arith.truncf %41 : vector<32x32xf32> to vector<32x32xbf16>
    %c0_12 = arith.constant 0 : index
    %c0_13 = arith.constant 0 : index
    %43 = vector.load %arg5[%c0_12, %c0_13] : memref<32x16xbf16, #tpu.memory_space<vmem>>, vector<32x16xbf16>
    %cst_14 = arith.constant dense<0.000000e+00> : vector<32x16xf32>
    %44 = tpu.matmul %42, %43, %cst_14 {dimension_numbers = #tpu.dot_dimension_numbers<[1], [0], [0], [1], [0, 0, 1, 1], [], []>} : vector<32x32xbf16>, vector<32x16xbf16>, vector<32x16xf32> -> vector<32x16xf32>
    %c0_15 = arith.constant 0 : index
    %c0_16 = arith.constant 0 : index
    %45 = vector.load %arg6[%c0_15, %c0_16] : memref<1x16xf32, #tpu.memory_space<vmem>>, vector<1x16xf32>
    %46 = vector.broadcast %45 : vector<1x16xf32> to vector<32x16xf32>
    %47 = arith.addf %44, %46 : vector<32x16xf32>
    %cst_17 = arith.constant 0.000000e+00 : f32
    %48 = vector.broadcast %cst_17 : f32 to vector<32x16xf32>
    %49 = arith.maximumf %47, %48 : vector<32x16xf32>
    %50 = vector.shape_cast %49 : vector<32x16xf32> to vector<4x8x16xf32>
    %51 = tpu.iota {dimensions = array<i32: 1>} : vector<4x8x16xi32>
    %c0_18 = arith.constant 0 : index
    %c0_19 = arith.constant 0 : index
    %c0_20 = arith.constant 0 : index
    %52 = vector.load %arg2[%c0_18, %c0_19, %c0_20] : memref<4x1x1xi32, #tpu.memory_space<vmem>>, vector<4x1x1xi32>
    %53 = vector.broadcast %52 : vector<4x1x1xi32> to vector<4x8x16xi32>
    %54 = arith.cmpi slt, %51, %53 : vector<4x8x16xi32>
    %cst_21 = arith.constant -9.99999984E+17 : f32
    %55 = vector.broadcast %cst_21 : f32 to vector<4x8x16xf32>
    %56 = arith.select %54, %50, %55 : vector<4x8x16xi1>, vector<4x8x16xf32>
    %cst_22 = arith.constant dense<0xFF800000> : vector<4x8xf32>
    %57 = vector.multi_reduction <maximumf>, %56, %cst_22 [2] : vector<4x8x16xf32> to vector<4x8xf32>
    %58 = vector.shape_cast %57 : vector<4x8xf32> to vector<4x8x1xf32>
    %59 = vector.broadcast %58 : vector<4x8x1xf32> to vector<4x8x16xf32>
    %60 = arith.subf %56, %59 : vector<4x8x16xf32>
    %61 = math.exp %60 : vector<4x8x16xf32>
    %cst_23 = arith.constant dense<0.000000e+00> : vector<4x8xf32>
    %62 = vector.multi_reduction <add>, %61, %cst_23 [2] : vector<4x8x16xf32> to vector<4x8xf32>
    %63 = vector.shape_cast %62 : vector<4x8xf32> to vector<4x8x1xf32>
    %64 = tpu.reciprocal %63 {approx = true} : vector<4x8x1xf32> -> vector<4x8x1xf32>
    %65 = vector.broadcast %64 : vector<4x8x1xf32> to vector<4x8x16xf32>
    %66 = arith.mulf %61, %65 : vector<4x8x16xf32>
    %67 = vector.shape_cast %9 : vector<32x32xf32> to vector<4x8x32xf32>
    %cst_24 = arith.constant dense<0.000000e+00> : vector<4x16xf32>
    %68 = vector.multi_reduction <add>, %66, %cst_24 [1] : vector<4x8x16xf32> to vector<4x16xf32>
    %69 = vector.extract_strided_slice %66 {offsets = [0, 0, 0], sizes = [4, 8, 1], strides = [1, 1, 1]} : vector<4x8x16xf32> to vector<4x8x1xf32>
    %70 = vector.broadcast %69 : vector<4x8x1xf32> to vector<4x8x32xf32>
    %71 = arith.mulf %70, %67 : vector<4x8x32xf32>
    %cst_25 = arith.constant dense<0.000000e+00> : vector<4x32xf32>
    %72 = vector.multi_reduction <add>, %71, %cst_25 [1] : vector<4x8x32xf32> to vector<4x32xf32>
    %73 = vector.extract_strided_slice %68 {offsets = [0, 0], sizes = [4, 1], strides = [1, 1]} : vector<4x16xf32> to vector<4x1xf32>
    %c0_26 = arith.constant 0 : index
    %c0_27 = arith.constant 0 : index
    %74 = vector.load %arg7[%c0_26, %c0_27] : memref<16x32xf32, #tpu.memory_space<vmem>>, vector<1x32xf32>
    %75 = vector.broadcast %73 : vector<4x1xf32> to vector<4x32xf32>
    %76 = vector.broadcast %74 : vector<1x32xf32> to vector<4x32xf32>
    %77 = arith.mulf %75, %76 : vector<4x32xf32>
    %78 = arith.subf %72, %77 : vector<4x32xf32>
    %79 = arith.mulf %78, %78 : vector<4x32xf32>
    %cst_28 = arith.constant dense<0.000000e+00> : vector<4xf32>
    %80 = vector.multi_reduction <add>, %79, %cst_28 [1] : vector<4x32xf32> to vector<4xf32>
    %81 = vector.shape_cast %80 : vector<4xf32> to vector<4x1xf32>
    %cst_29 = arith.constant 1.000000e-24 : f32
    %82 = vector.broadcast %cst_29 : f32 to vector<4x1xf32>
    %83 = arith.maximumf %81, %82 : vector<4x1xf32>
    %84 = math.rsqrt %83 : vector<4x1xf32>
    %85 = vector.broadcast %84 : vector<4x1xf32> to vector<4x32xf32>
    %86 = arith.mulf %78, %85 : vector<4x32xf32>
    %87 = vector.extract_strided_slice %66 {offsets = [0, 0, 1], sizes = [4, 8, 1], strides = [1, 1, 1]} : vector<4x8x16xf32> to vector<4x8x1xf32>
    %88 = vector.broadcast %87 : vector<4x8x1xf32> to vector<4x8x32xf32>
    %89 = arith.mulf %88, %67 : vector<4x8x32xf32>
    %cst_30 = arith.constant dense<0.000000e+00> : vector<4x32xf32>
    %90 = vector.multi_reduction <add>, %89, %cst_30 [1] : vector<4x8x32xf32> to vector<4x32xf32>
    %91 = vector.extract_strided_slice %68 {offsets = [0, 1], sizes = [4, 1], strides = [1, 1]} : vector<4x16xf32> to vector<4x1xf32>
    %c1_31 = arith.constant 1 : index
    %c0_32 = arith.constant 0 : index
    %92 = vector.load %arg7[%c1_31, %c0_32] : memref<16x32xf32, #tpu.memory_space<vmem>>, vector<1x32xf32>
    %93 = vector.broadcast %91 : vector<4x1xf32> to vector<4x32xf32>
    %94 = vector.broadcast %92 : vector<1x32xf32> to vector<4x32xf32>
    %95 = arith.mulf %93, %94 : vector<4x32xf32>
    %96 = arith.subf %90, %95 : vector<4x32xf32>
    %97 = arith.mulf %96, %96 : vector<4x32xf32>
    %cst_33 = arith.constant dense<0.000000e+00> : vector<4xf32>
    %98 = vector.multi_reduction <add>, %97, %cst_33 [1] : vector<4x32xf32> to vector<4xf32>
    %99 = vector.shape_cast %98 : vector<4xf32> to vector<4x1xf32>
    %cst_34 = arith.constant 1.000000e-24 : f32
    %100 = vector.broadcast %cst_34 : f32 to vector<4x1xf32>
    %101 = arith.maximumf %99, %100 : vector<4x1xf32>
    %102 = math.rsqrt %101 : vector<4x1xf32>
    %103 = vector.broadcast %102 : vector<4x1xf32> to vector<4x32xf32>
    %104 = arith.mulf %96, %103 : vector<4x32xf32>
    %105 = vector.extract_strided_slice %66 {offsets = [0, 0, 2], sizes = [4, 8, 1], strides = [1, 1, 1]} : vector<4x8x16xf32> to vector<4x8x1xf32>
    %106 = vector.broadcast %105 : vector<4x8x1xf32> to vector<4x8x32xf32>
    %107 = arith.mulf %106, %67 : vector<4x8x32xf32>
    %cst_35 = arith.constant dense<0.000000e+00> : vector<4x32xf32>
    %108 = vector.multi_reduction <add>, %107, %cst_35 [1] : vector<4x8x32xf32> to vector<4x32xf32>
    %109 = vector.extract_strided_slice %68 {offsets = [0, 2], sizes = [4, 1], strides = [1, 1]} : vector<4x16xf32> to vector<4x1xf32>
    %c2_36 = arith.constant 2 : index
    %c0_37 = arith.constant 0 : index
    %110 = vector.load %arg7[%c2_36, %c0_37] : memref<16x32xf32, #tpu.memory_space<vmem>>, vector<1x32xf32>
    %111 = vector.broadcast %109 : vector<4x1xf32> to vector<4x32xf32>
    %112 = vector.broadcast %110 : vector<1x32xf32> to vector<4x32xf32>
    %113 = arith.mulf %111, %112 : vector<4x32xf32>
    %114 = arith.subf %108, %113 : vector<4x32xf32>
    %115 = arith.mulf %114, %114 : vector<4x32xf32>
    %cst_38 = arith.constant dense<0.000000e+00> : vector<4xf32>
    %116 = vector.multi_reduction <add>, %115, %cst_38 [1] : vector<4x32xf32> to vector<4xf32>
    %117 = vector.shape_cast %116 : vector<4xf32> to vector<4x1xf32>
    %cst_39 = arith.constant 1.000000e-24 : f32
    %118 = vector.broadcast %cst_39 : f32 to vector<4x1xf32>
    %119 = arith.maximumf %117, %118 : vector<4x1xf32>
    %120 = math.rsqrt %119 : vector<4x1xf32>
    %121 = vector.broadcast %120 : vector<4x1xf32> to vector<4x32xf32>
    %122 = arith.mulf %114, %121 : vector<4x32xf32>
    %123 = vector.extract_strided_slice %66 {offsets = [0, 0, 3], sizes = [4, 8, 1], strides = [1, 1, 1]} : vector<4x8x16xf32> to vector<4x8x1xf32>
    %124 = vector.broadcast %123 : vector<4x8x1xf32> to vector<4x8x32xf32>
    %125 = arith.mulf %124, %67 : vector<4x8x32xf32>
    %cst_40 = arith.constant dense<0.000000e+00> : vector<4x32xf32>
    %126 = vector.multi_reduction <add>, %125, %cst_40 [1] : vector<4x8x32xf32> to vector<4x32xf32>
    %127 = vector.extract_strided_slice %68 {offsets = [0, 3], sizes = [4, 1], strides = [1, 1]} : vector<4x16xf32> to vector<4x1xf32>
    %c3 = arith.constant 3 : index
    %c0_41 = arith.constant 0 : index
    %128 = vector.load %arg7[%c3, %c0_41] : memref<16x32xf32, #tpu.memory_space<vmem>>, vector<1x32xf32>
    %129 = vector.broadcast %127 : vector<4x1xf32> to vector<4x32xf32>
    %130 = vector.broadcast %128 : vector<1x32xf32> to vector<4x32xf32>
    %131 = arith.mulf %129, %130 : vector<4x32xf32>
    %132 = arith.subf %126, %131 : vector<4x32xf32>
    %133 = arith.mulf %132, %132 : vector<4x32xf32>
    %cst_42 = arith.constant dense<0.000000e+00> : vector<4xf32>
    %134 = vector.multi_reduction <add>, %133, %cst_42 [1] : vector<4x32xf32> to vector<4xf32>
    %135 = vector.shape_cast %134 : vector<4xf32> to vector<4x1xf32>
    %cst_43 = arith.constant 1.000000e-24 : f32
    %136 = vector.broadcast %cst_43 : f32 to vector<4x1xf32>
    %137 = arith.maximumf %135, %136 : vector<4x1xf32>
    %138 = math.rsqrt %137 : vector<4x1xf32>
    %139 = vector.broadcast %138 : vector<4x1xf32> to vector<4x32xf32>
    %140 = arith.mulf %132, %139 : vector<4x32xf32>
    %141 = vector.extract_strided_slice %66 {offsets = [0, 0, 4], sizes = [4, 8, 1], strides = [1, 1, 1]} : vector<4x8x16xf32> to vector<4x8x1xf32>
    %142 = vector.broadcast %141 : vector<4x8x1xf32> to vector<4x8x32xf32>
    %143 = arith.mulf %142, %67 : vector<4x8x32xf32>
    %cst_44 = arith.constant dense<0.000000e+00> : vector<4x32xf32>
    %144 = vector.multi_reduction <add>, %143, %cst_44 [1] : vector<4x8x32xf32> to vector<4x32xf32>
    %145 = vector.extract_strided_slice %68 {offsets = [0, 4], sizes = [4, 1], strides = [1, 1]} : vector<4x16xf32> to vector<4x1xf32>
    %c4 = arith.constant 4 : index
    %c0_45 = arith.constant 0 : index
    %146 = vector.load %arg7[%c4, %c0_45] : memref<16x32xf32, #tpu.memory_space<vmem>>, vector<1x32xf32>
    %147 = vector.broadcast %145 : vector<4x1xf32> to vector<4x32xf32>
    %148 = vector.broadcast %146 : vector<1x32xf32> to vector<4x32xf32>
    %149 = arith.mulf %147, %148 : vector<4x32xf32>
    %150 = arith.subf %144, %149 : vector<4x32xf32>
    %151 = arith.mulf %150, %150 : vector<4x32xf32>
    %cst_46 = arith.constant dense<0.000000e+00> : vector<4xf32>
    %152 = vector.multi_reduction <add>, %151, %cst_46 [1] : vector<4x32xf32> to vector<4xf32>
    %153 = vector.shape_cast %152 : vector<4xf32> to vector<4x1xf32>
    %cst_47 = arith.constant 1.000000e-24 : f32
    %154 = vector.broadcast %cst_47 : f32 to vector<4x1xf32>
    %155 = arith.maximumf %153, %154 : vector<4x1xf32>
    %156 = math.rsqrt %155 : vector<4x1xf32>
    %157 = vector.broadcast %156 : vector<4x1xf32> to vector<4x32xf32>
    %158 = arith.mulf %150, %157 : vector<4x32xf32>
    %159 = vector.extract_strided_slice %66 {offsets = [0, 0, 5], sizes = [4, 8, 1], strides = [1, 1, 1]} : vector<4x8x16xf32> to vector<4x8x1xf32>
    %160 = vector.broadcast %159 : vector<4x8x1xf32> to vector<4x8x32xf32>
    %161 = arith.mulf %160, %67 : vector<4x8x32xf32>
    %cst_48 = arith.constant dense<0.000000e+00> : vector<4x32xf32>
    %162 = vector.multi_reduction <add>, %161, %cst_48 [1] : vector<4x8x32xf32> to vector<4x32xf32>
    %163 = vector.extract_strided_slice %68 {offsets = [0, 5], sizes = [4, 1], strides = [1, 1]} : vector<4x16xf32> to vector<4x1xf32>
    %c5 = arith.constant 5 : index
    %c0_49 = arith.constant 0 : index
    %164 = vector.load %arg7[%c5, %c0_49] : memref<16x32xf32, #tpu.memory_space<vmem>>, vector<1x32xf32>
    %165 = vector.broadcast %163 : vector<4x1xf32> to vector<4x32xf32>
    %166 = vector.broadcast %164 : vector<1x32xf32> to vector<4x32xf32>
    %167 = arith.mulf %165, %166 : vector<4x32xf32>
    %168 = arith.subf %162, %167 : vector<4x32xf32>
    %169 = arith.mulf %168, %168 : vector<4x32xf32>
    %cst_50 = arith.constant dense<0.000000e+00> : vector<4xf32>
    %170 = vector.multi_reduction <add>, %169, %cst_50 [1] : vector<4x32xf32> to vector<4xf32>
    %171 = vector.shape_cast %170 : vector<4xf32> to vector<4x1xf32>
    %cst_51 = arith.constant 1.000000e-24 : f32
    %172 = vector.broadcast %cst_51 : f32 to vector<4x1xf32>
    %173 = arith.maximumf %171, %172 : vector<4x1xf32>
    %174 = math.rsqrt %173 : vector<4x1xf32>
    %175 = vector.broadcast %174 : vector<4x1xf32> to vector<4x32xf32>
    %176 = arith.mulf %168, %175 : vector<4x32xf32>
    %177 = vector.extract_strided_slice %66 {offsets = [0, 0, 6], sizes = [4, 8, 1], strides = [1, 1, 1]} : vector<4x8x16xf32> to vector<4x8x1xf32>
    %178 = vector.broadcast %177 : vector<4x8x1xf32> to vector<4x8x32xf32>
    %179 = arith.mulf %178, %67 : vector<4x8x32xf32>
    %cst_52 = arith.constant dense<0.000000e+00> : vector<4x32xf32>
    %180 = vector.multi_reduction <add>, %179, %cst_52 [1] : vector<4x8x32xf32> to vector<4x32xf32>
    %181 = vector.extract_strided_slice %68 {offsets = [0, 6], sizes = [4, 1], strides = [1, 1]} : vector<4x16xf32> to vector<4x1xf32>
    %c6 = arith.constant 6 : index
    %c0_53 = arith.constant 0 : index
    %182 = vector.load %arg7[%c6, %c0_53] : memref<16x32xf32, #tpu.memory_space<vmem>>, vector<1x32xf32>
    %183 = vector.broadcast %181 : vector<4x1xf32> to vector<4x32xf32>
    %184 = vector.broadcast %182 : vector<1x32xf32> to vector<4x32xf32>
    %185 = arith.mulf %183, %184 : vector<4x32xf32>
    %186 = arith.subf %180, %185 : vector<4x32xf32>
    %187 = arith.mulf %186, %186 : vector<4x32xf32>
    %cst_54 = arith.constant dense<0.000000e+00> : vector<4xf32>
    %188 = vector.multi_reduction <add>, %187, %cst_54 [1] : vector<4x32xf32> to vector<4xf32>
    %189 = vector.shape_cast %188 : vector<4xf32> to vector<4x1xf32>
    %cst_55 = arith.constant 1.000000e-24 : f32
    %190 = vector.broadcast %cst_55 : f32 to vector<4x1xf32>
    %191 = arith.maximumf %189, %190 : vector<4x1xf32>
    %192 = math.rsqrt %191 : vector<4x1xf32>
    %193 = vector.broadcast %192 : vector<4x1xf32> to vector<4x32xf32>
    %194 = arith.mulf %186, %193 : vector<4x32xf32>
    %195 = vector.extract_strided_slice %66 {offsets = [0, 0, 7], sizes = [4, 8, 1], strides = [1, 1, 1]} : vector<4x8x16xf32> to vector<4x8x1xf32>
    %196 = vector.broadcast %195 : vector<4x8x1xf32> to vector<4x8x32xf32>
    %197 = arith.mulf %196, %67 : vector<4x8x32xf32>
    %cst_56 = arith.constant dense<0.000000e+00> : vector<4x32xf32>
    %198 = vector.multi_reduction <add>, %197, %cst_56 [1] : vector<4x8x32xf32> to vector<4x32xf32>
    %199 = vector.extract_strided_slice %68 {offsets = [0, 7], sizes = [4, 1], strides = [1, 1]} : vector<4x16xf32> to vector<4x1xf32>
    %c7 = arith.constant 7 : index
    %c0_57 = arith.constant 0 : index
    %200 = vector.load %arg7[%c7, %c0_57] : memref<16x32xf32, #tpu.memory_space<vmem>>, vector<1x32xf32>
    %201 = vector.broadcast %199 : vector<4x1xf32> to vector<4x32xf32>
    %202 = vector.broadcast %200 : vector<1x32xf32> to vector<4x32xf32>
    %203 = arith.mulf %201, %202 : vector<4x32xf32>
    %204 = arith.subf %198, %203 : vector<4x32xf32>
    %205 = arith.mulf %204, %204 : vector<4x32xf32>
    %cst_58 = arith.constant dense<0.000000e+00> : vector<4xf32>
    %206 = vector.multi_reduction <add>, %205, %cst_58 [1] : vector<4x32xf32> to vector<4xf32>
    %207 = vector.shape_cast %206 : vector<4xf32> to vector<4x1xf32>
    %cst_59 = arith.constant 1.000000e-24 : f32
    %208 = vector.broadcast %cst_59 : f32 to vector<4x1xf32>
    %209 = arith.maximumf %207, %208 : vector<4x1xf32>
    %210 = math.rsqrt %209 : vector<4x1xf32>
    %211 = vector.broadcast %210 : vector<4x1xf32> to vector<4x32xf32>
    %212 = arith.mulf %204, %211 : vector<4x32xf32>
    %213 = vector.extract_strided_slice %66 {offsets = [0, 0, 8], sizes = [4, 8, 1], strides = [1, 1, 1]} : vector<4x8x16xf32> to vector<4x8x1xf32>
    %214 = vector.broadcast %213 : vector<4x8x1xf32> to vector<4x8x32xf32>
    %215 = arith.mulf %214, %67 : vector<4x8x32xf32>
    %cst_60 = arith.constant dense<0.000000e+00> : vector<4x32xf32>
    %216 = vector.multi_reduction <add>, %215, %cst_60 [1] : vector<4x8x32xf32> to vector<4x32xf32>
    %217 = vector.extract_strided_slice %68 {offsets = [0, 8], sizes = [4, 1], strides = [1, 1]} : vector<4x16xf32> to vector<4x1xf32>
    %c8 = arith.constant 8 : index
    %c0_61 = arith.constant 0 : index
    %218 = vector.load %arg7[%c8, %c0_61] : memref<16x32xf32, #tpu.memory_space<vmem>>, vector<1x32xf32>
    %219 = vector.broadcast %217 : vector<4x1xf32> to vector<4x32xf32>
    %220 = vector.broadcast %218 : vector<1x32xf32> to vector<4x32xf32>
    %221 = arith.mulf %219, %220 : vector<4x32xf32>
    %222 = arith.subf %216, %221 : vector<4x32xf32>
    %223 = arith.mulf %222, %222 : vector<4x32xf32>
    %cst_62 = arith.constant dense<0.000000e+00> : vector<4xf32>
    %224 = vector.multi_reduction <add>, %223, %cst_62 [1] : vector<4x32xf32> to vector<4xf32>
    %225 = vector.shape_cast %224 : vector<4xf32> to vector<4x1xf32>
    %cst_63 = arith.constant 1.000000e-24 : f32
    %226 = vector.broadcast %cst_63 : f32 to vector<4x1xf32>
    %227 = arith.maximumf %225, %226 : vector<4x1xf32>
    %228 = math.rsqrt %227 : vector<4x1xf32>
    %229 = vector.broadcast %228 : vector<4x1xf32> to vector<4x32xf32>
    %230 = arith.mulf %222, %229 : vector<4x32xf32>
    %231 = vector.extract_strided_slice %66 {offsets = [0, 0, 9], sizes = [4, 8, 1], strides = [1, 1, 1]} : vector<4x8x16xf32> to vector<4x8x1xf32>
    %232 = vector.broadcast %231 : vector<4x8x1xf32> to vector<4x8x32xf32>
    %233 = arith.mulf %232, %67 : vector<4x8x32xf32>
    %cst_64 = arith.constant dense<0.000000e+00> : vector<4x32xf32>
    %234 = vector.multi_reduction <add>, %233, %cst_64 [1] : vector<4x8x32xf32> to vector<4x32xf32>
    %235 = vector.extract_strided_slice %68 {offsets = [0, 9], sizes = [4, 1], strides = [1, 1]} : vector<4x16xf32> to vector<4x1xf32>
    %c9 = arith.constant 9 : index
    %c0_65 = arith.constant 0 : index
    %236 = vector.load %arg7[%c9, %c0_65] : memref<16x32xf32, #tpu.memory_space<vmem>>, vector<1x32xf32>
    %237 = vector.broadcast %235 : vector<4x1xf32> to vector<4x32xf32>
    %238 = vector.broadcast %236 : vector<1x32xf32> to vector<4x32xf32>
    %239 = arith.mulf %237, %238 : vector<4x32xf32>
    %240 = arith.subf %234, %239 : vector<4x32xf32>
    %241 = arith.mulf %240, %240 : vector<4x32xf32>
    %cst_66 = arith.constant dense<0.000000e+00> : vector<4xf32>
    %242 = vector.multi_reduction <add>, %241, %cst_66 [1] : vector<4x32xf32> to vector<4xf32>
    %243 = vector.shape_cast %242 : vector<4xf32> to vector<4x1xf32>
    %cst_67 = arith.constant 1.000000e-24 : f32
    %244 = vector.broadcast %cst_67 : f32 to vector<4x1xf32>
    %245 = arith.maximumf %243, %244 : vector<4x1xf32>
    %246 = math.rsqrt %245 : vector<4x1xf32>
    %247 = vector.broadcast %246 : vector<4x1xf32> to vector<4x32xf32>
    %248 = arith.mulf %240, %247 : vector<4x32xf32>
    %249 = vector.extract_strided_slice %66 {offsets = [0, 0, 10], sizes = [4, 8, 1], strides = [1, 1, 1]} : vector<4x8x16xf32> to vector<4x8x1xf32>
    %250 = vector.broadcast %249 : vector<4x8x1xf32> to vector<4x8x32xf32>
    %251 = arith.mulf %250, %67 : vector<4x8x32xf32>
    %cst_68 = arith.constant dense<0.000000e+00> : vector<4x32xf32>
    %252 = vector.multi_reduction <add>, %251, %cst_68 [1] : vector<4x8x32xf32> to vector<4x32xf32>
    %253 = vector.extract_strided_slice %68 {offsets = [0, 10], sizes = [4, 1], strides = [1, 1]} : vector<4x16xf32> to vector<4x1xf32>
    %c10 = arith.constant 10 : index
    %c0_69 = arith.constant 0 : index
    %254 = vector.load %arg7[%c10, %c0_69] : memref<16x32xf32, #tpu.memory_space<vmem>>, vector<1x32xf32>
    %255 = vector.broadcast %253 : vector<4x1xf32> to vector<4x32xf32>
    %256 = vector.broadcast %254 : vector<1x32xf32> to vector<4x32xf32>
    %257 = arith.mulf %255, %256 : vector<4x32xf32>
    %258 = arith.subf %252, %257 : vector<4x32xf32>
    %259 = arith.mulf %258, %258 : vector<4x32xf32>
    %cst_70 = arith.constant dense<0.000000e+00> : vector<4xf32>
    %260 = vector.multi_reduction <add>, %259, %cst_70 [1] : vector<4x32xf32> to vector<4xf32>
    %261 = vector.shape_cast %260 : vector<4xf32> to vector<4x1xf32>
    %cst_71 = arith.constant 1.000000e-24 : f32
    %262 = vector.broadcast %cst_71 : f32 to vector<4x1xf32>
    %263 = arith.maximumf %261, %262 : vector<4x1xf32>
    %264 = math.rsqrt %263 : vector<4x1xf32>
    %265 = vector.broadcast %264 : vector<4x1xf32> to vector<4x32xf32>
    %266 = arith.mulf %258, %265 : vector<4x32xf32>
    %267 = vector.extract_strided_slice %66 {offsets = [0, 0, 11], sizes = [4, 8, 1], strides = [1, 1, 1]} : vector<4x8x16xf32> to vector<4x8x1xf32>
    %268 = vector.broadcast %267 : vector<4x8x1xf32> to vector<4x8x32xf32>
    %269 = arith.mulf %268, %67 : vector<4x8x32xf32>
    %cst_72 = arith.constant dense<0.000000e+00> : vector<4x32xf32>
    %270 = vector.multi_reduction <add>, %269, %cst_72 [1] : vector<4x8x32xf32> to vector<4x32xf32>
    %271 = vector.extract_strided_slice %68 {offsets = [0, 11], sizes = [4, 1], strides = [1, 1]} : vector<4x16xf32> to vector<4x1xf32>
    %c11 = arith.constant 11 : index
    %c0_73 = arith.constant 0 : index
    %272 = vector.load %arg7[%c11, %c0_73] : memref<16x32xf32, #tpu.memory_space<vmem>>, vector<1x32xf32>
    %273 = vector.broadcast %271 : vector<4x1xf32> to vector<4x32xf32>
    %274 = vector.broadcast %272 : vector<1x32xf32> to vector<4x32xf32>
    %275 = arith.mulf %273, %274 : vector<4x32xf32>
    %276 = arith.subf %270, %275 : vector<4x32xf32>
    %277 = arith.mulf %276, %276 : vector<4x32xf32>
    %cst_74 = arith.constant dense<0.000000e+00> : vector<4xf32>
    %278 = vector.multi_reduction <add>, %277, %cst_74 [1] : vector<4x32xf32> to vector<4xf32>
    %279 = vector.shape_cast %278 : vector<4xf32> to vector<4x1xf32>
    %cst_75 = arith.constant 1.000000e-24 : f32
    %280 = vector.broadcast %cst_75 : f32 to vector<4x1xf32>
    %281 = arith.maximumf %279, %280 : vector<4x1xf32>
    %282 = math.rsqrt %281 : vector<4x1xf32>
    %283 = vector.broadcast %282 : vector<4x1xf32> to vector<4x32xf32>
    %284 = arith.mulf %276, %283 : vector<4x32xf32>
    %285 = vector.extract_strided_slice %66 {offsets = [0, 0, 12], sizes = [4, 8, 1], strides = [1, 1, 1]} : vector<4x8x16xf32> to vector<4x8x1xf32>
    %286 = vector.broadcast %285 : vector<4x8x1xf32> to vector<4x8x32xf32>
    %287 = arith.mulf %286, %67 : vector<4x8x32xf32>
    %cst_76 = arith.constant dense<0.000000e+00> : vector<4x32xf32>
    %288 = vector.multi_reduction <add>, %287, %cst_76 [1] : vector<4x8x32xf32> to vector<4x32xf32>
    %289 = vector.extract_strided_slice %68 {offsets = [0, 12], sizes = [4, 1], strides = [1, 1]} : vector<4x16xf32> to vector<4x1xf32>
    %c12 = arith.constant 12 : index
    %c0_77 = arith.constant 0 : index
    %290 = vector.load %arg7[%c12, %c0_77] : memref<16x32xf32, #tpu.memory_space<vmem>>, vector<1x32xf32>
    %291 = vector.broadcast %289 : vector<4x1xf32> to vector<4x32xf32>
    %292 = vector.broadcast %290 : vector<1x32xf32> to vector<4x32xf32>
    %293 = arith.mulf %291, %292 : vector<4x32xf32>
    %294 = arith.subf %288, %293 : vector<4x32xf32>
    %295 = arith.mulf %294, %294 : vector<4x32xf32>
    %cst_78 = arith.constant dense<0.000000e+00> : vector<4xf32>
    %296 = vector.multi_reduction <add>, %295, %cst_78 [1] : vector<4x32xf32> to vector<4xf32>
    %297 = vector.shape_cast %296 : vector<4xf32> to vector<4x1xf32>
    %cst_79 = arith.constant 1.000000e-24 : f32
    %298 = vector.broadcast %cst_79 : f32 to vector<4x1xf32>
    %299 = arith.maximumf %297, %298 : vector<4x1xf32>
    %300 = math.rsqrt %299 : vector<4x1xf32>
    %301 = vector.broadcast %300 : vector<4x1xf32> to vector<4x32xf32>
    %302 = arith.mulf %294, %301 : vector<4x32xf32>
    %303 = vector.extract_strided_slice %66 {offsets = [0, 0, 13], sizes = [4, 8, 1], strides = [1, 1, 1]} : vector<4x8x16xf32> to vector<4x8x1xf32>
    %304 = vector.broadcast %303 : vector<4x8x1xf32> to vector<4x8x32xf32>
    %305 = arith.mulf %304, %67 : vector<4x8x32xf32>
    %cst_80 = arith.constant dense<0.000000e+00> : vector<4x32xf32>
    %306 = vector.multi_reduction <add>, %305, %cst_80 [1] : vector<4x8x32xf32> to vector<4x32xf32>
    %307 = vector.extract_strided_slice %68 {offsets = [0, 13], sizes = [4, 1], strides = [1, 1]} : vector<4x16xf32> to vector<4x1xf32>
    %c13 = arith.constant 13 : index
    %c0_81 = arith.constant 0 : index
    %308 = vector.load %arg7[%c13, %c0_81] : memref<16x32xf32, #tpu.memory_space<vmem>>, vector<1x32xf32>
    %309 = vector.broadcast %307 : vector<4x1xf32> to vector<4x32xf32>
    %310 = vector.broadcast %308 : vector<1x32xf32> to vector<4x32xf32>
    %311 = arith.mulf %309, %310 : vector<4x32xf32>
    %312 = arith.subf %306, %311 : vector<4x32xf32>
    %313 = arith.mulf %312, %312 : vector<4x32xf32>
    %cst_82 = arith.constant dense<0.000000e+00> : vector<4xf32>
    %314 = vector.multi_reduction <add>, %313, %cst_82 [1] : vector<4x32xf32> to vector<4xf32>
    %315 = vector.shape_cast %314 : vector<4xf32> to vector<4x1xf32>
    %cst_83 = arith.constant 1.000000e-24 : f32
    %316 = vector.broadcast %cst_83 : f32 to vector<4x1xf32>
    %317 = arith.maximumf %315, %316 : vector<4x1xf32>
    %318 = math.rsqrt %317 : vector<4x1xf32>
    %319 = vector.broadcast %318 : vector<4x1xf32> to vector<4x32xf32>
    %320 = arith.mulf %312, %319 : vector<4x32xf32>
    %321 = vector.extract_strided_slice %66 {offsets = [0, 0, 14], sizes = [4, 8, 1], strides = [1, 1, 1]} : vector<4x8x16xf32> to vector<4x8x1xf32>
    %322 = vector.broadcast %321 : vector<4x8x1xf32> to vector<4x8x32xf32>
    %323 = arith.mulf %322, %67 : vector<4x8x32xf32>
    %cst_84 = arith.constant dense<0.000000e+00> : vector<4x32xf32>
    %324 = vector.multi_reduction <add>, %323, %cst_84 [1] : vector<4x8x32xf32> to vector<4x32xf32>
    %325 = vector.extract_strided_slice %68 {offsets = [0, 14], sizes = [4, 1], strides = [1, 1]} : vector<4x16xf32> to vector<4x1xf32>
    %c14 = arith.constant 14 : index
    %c0_85 = arith.constant 0 : index
    %326 = vector.load %arg7[%c14, %c0_85] : memref<16x32xf32, #tpu.memory_space<vmem>>, vector<1x32xf32>
    %327 = vector.broadcast %325 : vector<4x1xf32> to vector<4x32xf32>
    %328 = vector.broadcast %326 : vector<1x32xf32> to vector<4x32xf32>
    %329 = arith.mulf %327, %328 : vector<4x32xf32>
    %330 = arith.subf %324, %329 : vector<4x32xf32>
    %331 = arith.mulf %330, %330 : vector<4x32xf32>
    %cst_86 = arith.constant dense<0.000000e+00> : vector<4xf32>
    %332 = vector.multi_reduction <add>, %331, %cst_86 [1] : vector<4x32xf32> to vector<4xf32>
    %333 = vector.shape_cast %332 : vector<4xf32> to vector<4x1xf32>
    %cst_87 = arith.constant 1.000000e-24 : f32
    %334 = vector.broadcast %cst_87 : f32 to vector<4x1xf32>
    %335 = arith.maximumf %333, %334 : vector<4x1xf32>
    %336 = math.rsqrt %335 : vector<4x1xf32>
    %337 = vector.broadcast %336 : vector<4x1xf32> to vector<4x32xf32>
    %338 = arith.mulf %330, %337 : vector<4x32xf32>
    %339 = vector.extract_strided_slice %66 {offsets = [0, 0, 15], sizes = [4, 8, 1], strides = [1, 1, 1]} : vector<4x8x16xf32> to vector<4x8x1xf32>
    %340 = vector.broadcast %339 : vector<4x8x1xf32> to vector<4x8x32xf32>
    %341 = arith.mulf %340, %67 : vector<4x8x32xf32>
    %cst_88 = arith.constant dense<0.000000e+00> : vector<4x32xf32>
    %342 = vector.multi_reduction <add>, %341, %cst_88 [1] : vector<4x8x32xf32> to vector<4x32xf32>
    %343 = vector.extract_strided_slice %68 {offsets = [0, 15], sizes = [4, 1], strides = [1, 1]} : vector<4x16xf32> to vector<4x1xf32>
    %c15 = arith.constant 15 : index
    %c0_89 = arith.constant 0 : index
    %344 = vector.load %arg7[%c15, %c0_89] : memref<16x32xf32, #tpu.memory_space<vmem>>, vector<1x32xf32>
    %345 = vector.broadcast %343 : vector<4x1xf32> to vector<4x32xf32>
    %346 = vector.broadcast %344 : vector<1x32xf32> to vector<4x32xf32>
    %347 = arith.mulf %345, %346 : vector<4x32xf32>
    %348 = arith.subf %342, %347 : vector<4x32xf32>
    %349 = arith.mulf %348, %348 : vector<4x32xf32>
    %cst_90 = arith.constant dense<0.000000e+00> : vector<4xf32>
    %350 = vector.multi_reduction <add>, %349, %cst_90 [1] : vector<4x32xf32> to vector<4xf32>
    %351 = vector.shape_cast %350 : vector<4xf32> to vector<4x1xf32>
    %cst_91 = arith.constant 1.000000e-24 : f32
    %352 = vector.broadcast %cst_91 : f32 to vector<4x1xf32>
    %353 = arith.maximumf %351, %352 : vector<4x1xf32>
    %354 = math.rsqrt %353 : vector<4x1xf32>
    %355 = vector.broadcast %354 : vector<4x1xf32> to vector<4x32xf32>
    %356 = arith.mulf %348, %355 : vector<4x32xf32>
    %357 = tpu.concatenate %86, %104, %122, %140, %158, %176, %194, %212, %230, %248, %266, %284, %302, %320, %338, %356 in 1 : vector<4x32xf32>, vector<4x32xf32>, vector<4x32xf32>, vector<4x32xf32>, vector<4x32xf32>, vector<4x32xf32>, vector<4x32xf32>, vector<4x32xf32>, vector<4x32xf32>, vector<4x32xf32>, vector<4x32xf32>, vector<4x32xf32>, vector<4x32xf32>, vector<4x32xf32>, vector<4x32xf32>, vector<4x32xf32> -> vector<4x512xf32>
    %358 = arith.mulf %357, %357 : vector<4x512xf32>
    %cst_92 = arith.constant dense<0.000000e+00> : vector<4xf32>
    %359 = vector.multi_reduction <add>, %358, %cst_92 [1] : vector<4x512xf32> to vector<4xf32>
    %360 = vector.shape_cast %359 : vector<4xf32> to vector<4x1xf32>
    %cst_93 = arith.constant 1.000000e-24 : f32
    %361 = vector.broadcast %cst_93 : f32 to vector<4x1xf32>
    %362 = arith.maximumf %360, %361 : vector<4x1xf32>
    %363 = math.rsqrt %362 : vector<4x1xf32>
    %364 = vector.broadcast %363 : vector<4x1xf32> to vector<4x512xf32>
    %365 = arith.mulf %357, %364 : vector<4x512xf32>
    %c0_94 = arith.constant 0 : index
    %c0_95 = arith.constant 0 : index
    %366 = vector.load %arg8[%c0_94, %c0_95] : memref<4x512xf32, #tpu.memory_space<vmem>>, vector<4x512xf32>
    tpu.vector_store %arg8[%c0_94, %c0_95], %365 {strides = array<i32>} : memref<4x512xf32, #tpu.memory_space<vmem>>, vector<4x512xf32>,
    return
  }
  func.func @transform_0(%arg0: i32) -> (i32, i32, i32) {
    %c0_i32 = arith.constant 0 : i32
    %c0_i32_0 = arith.constant 0 : i32
    %c0_i32_1 = arith.constant 0 : i32
    return %arg0, %c0_i32, %c0_i32_0 : i32, i32, i32
  }
  func.func @transform_1(%arg0: i32) -> (i32, i32, i32) {
    %c0_i32 = arith.constant 0 : i32
    %c0_i32_0 = arith.constant 0 : i32
    %c0_i32_1 = arith.constant 0 : i32
    return %arg0, %c0_i32, %c0_i32_0 : i32, i32, i32
  }
  func.func @transform_2(%arg0: i32) -> (i32, i32) {
    %c0_i32 = arith.constant 0 : i32
    %c0_i32_0 = arith.constant 0 : i32
    %c0_i32_1 = arith.constant 0 : i32
    return %c0_i32, %c0_i32_0 : i32, i32
  }
  func.func @transform_3(%arg0: i32) -> (i32, i32) {
    %c0_i32 = arith.constant 0 : i32
    %c0_i32_0 = arith.constant 0 : i32
    %c0_i32_1 = arith.constant 0 : i32
    return %c0_i32, %c0_i32_0 : i32, i32
  }
  func.func @transform_4(%arg0: i32) -> (i32, i32) {
    %c0_i32 = arith.constant 0 : i32
    %c0_i32_0 = arith.constant 0 : i32
    %c0_i32_1 = arith.constant 0 : i32
    return %c0_i32, %c0_i32_0 : i32, i32
  }
  func.func @transform_5(%arg0: i32) -> (i32, i32) {
    %c0_i32 = arith.constant 0 : i32
    %c0_i32_0 = arith.constant 0 : i32
    %c0_i32_1 = arith.constant 0 : i32
    return %c0_i32, %c0_i32_0 : i32, i32
  }
  func.func @transform_6(%arg0: i32) -> (i32, i32) {
    %c0_i32 = arith.constant 0 : i32
    %c0_i32_0 = arith.constant 0 : i32
    %c0_i32_1 = arith.constant 0 : i32
    return %c0_i32, %c0_i32_0 : i32, i32
  }
  func.func @transform_7(%arg0: i32) -> (i32, i32) {
    %c0_i32 = arith.constant 0 : i32
    %c0_i32_0 = arith.constant 0 : i32
    return %arg0, %c0_i32 : i32, i32
  }
}

</mosaic_0001>

<llo_original>
// kernel: tpu_custom_call.1
$region0: #{tpu_custom_call.1}
  #allocation0 [shape = 'u32[]', space=smem, size = 0x4, offset = 0x4, fixed_abs, tag = 'smem constant byte address 0x4 - core index']
  #allocation1 [shape = 'u32[72,128]{1,0:T(1,128)}', space=vmem, size = 0x9000, scoped, tag = 'internal scratch']
  %s0 = inlined_call_operand.hbm [shape: f32[4,8,32], index: 0, kind: input, shape index: {}]
  %s1 = inlined_call_operand.vmem [shape: s32[4,1,1], index: 1, kind: input, shape index: {}]
  %s2 = inlined_call_operand.vmem [shape: f32[3,32], index: 2, kind: input, shape index: {}]
  %s3 = inlined_call_operand.vmem [shape: f32[1,32], index: 3, kind: input, shape index: {}]
  %s4 = inlined_call_operand.vmem [shape: bf16[32,16], index: 4, kind: input, shape index: {}]
  %s5 = inlined_call_operand.vmem [shape: f32[1,16], index: 5, kind: input, shape index: {}]
  %s6 = inlined_call_operand.vmem [shape: f32[16,32], index: 6, kind: input, shape index: {}]
  %s7 = inlined_call_operand.hbm [shape: f32[4,512], index: 7, kind: output, shape index: {}]
  %s8 = sld [smem:[#allocation0]]
  $region42: #{tpu_custom_call.1} parent=0
    _
  %s10 = ssub.s32 1, %s8
  %s11 = scalar_select 0, %s10, %s8
  $region1: #{tpu_custom_call.1} parent=0
    #allocation2 [shape = 'u8[16384]{0}', space=vmem, size = 0x4000, scoped, tag = 'input window, operand 0, single buffered']
    #allocation3 [shape = 's32[1]{0}', space=sflag, size = 0x4, scoped, tag = 'scoped memory for tpu_custom_call.1']
    #allocation4 [shape = 's32[1]{0}', space=sflag, size = 0x4, scoped, tag = 'scoped memory for tpu_custom_call.1']
    #allocation5 [shape = 'u8[8192]{0}', space=vmem, size = 0x2000, scoped, tag = 'output window, operand 0, single buffered']
    %12 = vsyncpa [#allocation3], 0
    %13 = vsyncpa [#allocation4], 0
    // Predicated region
    $region2: #{tpu_custom_call.1} parent=1 // pred_check
      _
    $region3: #{tpu_custom_call.1} parent=1 // pred_check_branch
      %15 = sbr.rel (0) target = $region5
    $region4: #{tpu_custom_call.1} parent=1 // pred_region
      %17 = vsyncadd [#allocation3], 0
      %s18 = sshll.u32 %s0, 4
      %s19 = int_to_ptr.hbm [resolvable:$true] %s18
      %s20 = sshll.u32 [#allocation2], 4
      %s21 = int_to_ptr.vmem [resolvable:$true] %s20
      %26 = dma.hbm_to_vmem [thread:$0]  %s19, 512, %s21, [#allocation3], 128, 128, 8
    $region5: #{tpu_custom_call.1} parent=1 // pred_fallthru
      _
    // Predicated region
    $region6: #{tpu_custom_call.1} parent=1 // pred_check
      _
    $region7: #{tpu_custom_call.1} parent=1 // pred_check_branch
      %28 = sbr.rel (0) target = $region9
    $region8: #{tpu_custom_call.1} parent=1 // pred_region
      _
    $region9: #{tpu_custom_call.1} parent=1 // pred_fallthru
      _
    // Predicated region
    $region10: #{tpu_custom_call.1} parent=1 // pred_check
      _
    $region11: #{tpu_custom_call.1} parent=1 // pred_check_branch
      %30 = sbr.rel (0) target = $region13
    $region12: #{tpu_custom_call.1} parent=1 // pred_region
      _
    $region13: #{tpu_custom_call.1} parent=1 // pred_fallthru
      _
    // Predicated region
    $region14: #{tpu_custom_call.1} parent=1 // pred_check
      _
    $region15: #{tpu_custom_call.1} parent=1 // pred_check_branch
      %32 = sbr.rel (0) target = $region17
    $region16: #{tpu_custom_call.1} parent=1 // pred_region
      _
    $region17: #{tpu_custom_call.1} parent=1 // pred_fallthru
      _
    // Predicated region
    $region18: #{tpu_custom_call.1} parent=1 // pred_check
      _
    $region19: #{tpu_custom_call.1} parent=1 // pred_check_branch
      %34 = sbr.rel (0) target = $region21
    $region20: #{tpu_custom_call.1} parent=1 // pred_region
      _
    $region21: #{tpu_custom_call.1} parent=1 // pred_fallthru
      _
    // Predicated region
    $region22: #{tpu_custom_call.1} parent=1 // pred_check
      _
    $region23: #{tpu_custom_call.1} parent=1 // pred_check_branch
      %36 = sbr.rel (0) target = $region25
    $region24: #{tpu_custom_call.1} parent=1 // pred_region
      _
    $region25: #{tpu_custom_call.1} parent=1 // pred_fallthru
      _
    // Predicated region
    $region26: #{tpu_custom_call.1} parent=1 // pred_check
      _
    $region27: #{tpu_custom_call.1} parent=1 // pred_check_branch
      %38 = sbr.rel (0) target = $region29
    $region28: #{tpu_custom_call.1} parent=1 // pred_region
      _
    $region29: #{tpu_custom_call.1} parent=1 // pred_fallthru
      _
    // Predicated region
    $region30: #{tpu_custom_call.1} parent=1 // pred_check
      _
    $region31: #{tpu_custom_call.1} parent=1 // pred_check_branch
      %40 = sbr.rel (0) target = $region33
    $region32: #{tpu_custom_call.1} parent=1 // pred_region
      %42 = dma.done [#allocation3], 512
    $region33: #{tpu_custom_call.1} parent=1 // pred_fallthru
      _
    %v44 = vld [vmem:[#allocation2] sm:$0xff]
    %v45 = vld [vmem:[#allocation2 + $0x8] sm:$0xff]
    %v46 = vld [vmem:[#allocation2 + $0x10] sm:$0xff]
    %v47 = vld [vmem:[#allocation2 + $0x18] sm:$0xff]
    %v48 = vmul.f32 %v44, %v44
    %v49 = vmul.f32 %v45, %v45
    %v50 = vmul.f32 %v46, %v46
    %v51 = vmul.f32 %v47, %v47
    %vm52 = vcmask 261120
    %v53 = vsel %vm52, %v48, 0.0
    %54 = vadd.xlane.f32.xlu0 %v53
    %v55 = vpop.xlane.xlu0 %54
    %v56 = vsel %vm52, %v49, 0.0
    %57 = vadd.xlane.f32.xlu0 %v56
    %v58 = vpop.xlane.xlu0 %57
    %v59 = vsel %vm52, %v50, 0.0
    %60 = vadd.xlane.f32.xlu0 %v59
    %v61 = vpop.xlane.xlu0 %60
    %v62 = vsel %vm52, %v51, 0.0
    %63 = vadd.xlane.f32.xlu0 %v62
    %v64 = vpop.xlane.xlu0 %63
    %v65 = vmax.f32 %v55, 1e-24
    %v66 = vmax.f32 %v58, 1e-24
    %v67 = vmax.f32 %v61, 1e-24
    %v68 = vmax.f32 %v64, 1e-24
    %v69 = vrsqrt.pop %v65
    %v70 = vmul.f32 %v69, %v65
    %v71 = vmul.f32 %v70, %v69
    %v72 = vmul.f32 0.5, %v71
    %v73 = vsub.f32 1.5, %v72
    %v74 = vmul.f32 %v69, %v73
    %vm75 = vweird.f32 %v65
    %vm76 = vweird.f32 %v69
    %vm77 = vmor %vm75, %vm76
    %v78 = vsel %vm77, %v69, %v74
    %v79 = vrsqrt.pop %v66
    %v80 = vmul.f32 %v79, %v66
    %v81 = vmul.f32 %v80, %v79
    %v82 = vmul.f32 0.5, %v81
    %v83 = vsub.f32 1.5, %v82
    %v84 = vmul.f32 %v79, %v83
    %vm85 = vweird.f32 %v66
    %vm86 = vweird.f32 %v79
    %vm87 = vmor %vm85, %vm86
    %v88 = vsel %vm87, %v79, %v84
    %v89 = vrsqrt.pop %v67
    %v90 = vmul.f32 %v89, %v67
    %v91 = vmul.f32 %v90, %v89
    %v92 = vmul.f32 0.5, %v91
    %v93 = vsub.f32 1.5, %v92
    %v94 = vmul.f32 %v89, %v93
    %vm95 = vweird.f32 %v67
    %vm96 = vweird.f32 %v89
    %vm97 = vmor %vm95, %vm96
    %v98 = vsel %vm97, %v89, %v94
    %v99 = vrsqrt.pop %v68
    %v100 = vmul.f32 %v99, %v68
    %v101 = vmul.f32 %v100, %v99
    %v102 = vmul.f32 0.5, %v101
    %v103 = vsub.f32 1.5, %v102
    %v104 = vmul.f32 %v99, %v103
    %vm105 = vweird.f32 %v68
    %vm106 = vweird.f32 %v99
    %vm107 = vmor %vm105, %vm106
    %v108 = vsel %vm107, %v99, %v104
    %v109 = vmul.f32 %v44, %v78
    %v110 = vmul.f32 %v45, %v88
    %v111 = vmul.f32 %v46, %v98
    %v112 = vmul.f32 %v47, %v108
    %v113 = vlaneseq
    %v114 = vshrl.u32 %v113, 7
    %vm115 = vcmp.eq.s32.totalorder %v114, 0
    %v116 = vrot.slane %v109, 7
    %v117 = vrot.slane %v110, 7
    %v118 = vrot.slane %v111, 7
    %v119 = vrot.slane %v112, 7
    %vm120 = vcmp.lt.s32.totalorder %v114, 1
    %v121 = vsel %vm120, %v118, %v119
    %v122 = vsel %vm120, %v117, %v118
    %v123 = vsel %vm120, %v116, %v117
    %v124 = vsel %vm120, %v119, %v116
    %v125 = vsel %vm115, 1, 0
    %vm126 = vcmp.eq.s32.totalorder %v125, 1
    %v127 = vsel %vm126, 0.0, %v124
    %v128 = vsel %vm126, 0.0, %v123
    %v129 = vsel %vm126, 0.0, %v122
    %v130 = vsel %vm126, 0.0, %v121
    %vm131 = vcmp.eq.s32.totalorder %v114, 7
    %v132 = vrot.slane %v109, 1
    %v133 = vrot.slane %v110, 1
    %v134 = vrot.slane %v111, 1
    %v135 = vrot.slane %v112, 1
    %vm136 = vcmp.lt.s32.totalorder %v114, 7
    %v137 = vsel %vm136, %v134, %v135
    %v138 = vsel %vm136, %v133, %v134
    %v139 = vsel %vm136, %v132, %v133
    %v140 = vsel %vm136, %v135, %v132
    %v141 = vsel %vm131, 1, 0
    %vm142 = vcmp.eq.s32.totalorder %v141, 1
    %v143 = vsel %vm142, 0.0, %v139
    %v144 = vsel %vm142, 0.0, %v138
    %v145 = vsel %vm142, 0.0, %v137
    %v146 = vsel %vm142, 0.0, %v140
    %v147 = vld [vmem:[%s2] sm:$0x1]
    %v148 = vperm.slane %v147, 0
    %v149 = vmul.f32 %v127, %v148
    %v150 = vmul.f32 %v128, %v148
    %v151 = vmul.f32 %v129, %v148
    %v152 = vmul.f32 %v130, %v148
    %v153 = vld [vmem:[%s2 + $0x1] sm:$0x1]
    %v154 = vperm.slane %v153, 0
    %v155 = vmul.f32 %v109, %v154
    %v156 = vmul.f32 %v110, %v154
    %v157 = vmul.f32 %v111, %v154
    %v158 = vmul.f32 %v112, %v154
    %v159 = vadd.f32 %v149, %v155
    %v160 = vadd.f32 %v150, %v156
    %v161 = vadd.f32 %v151, %v157
    %v162 = vadd.f32 %v152, %v158
    %v163 = vld [vmem:[%s2 + $0x2] sm:$0x1]
    %v164 = vperm.slane %v163, 0
    %v165 = vmul.f32 %v143, %v164
    %v166 = vmul.f32 %v144, %v164
    %v167 = vmul.f32 %v145, %v164
    %v168 = vmul.f32 %v146, %v164
    %v169 = vadd.f32 %v159, %v165
    %v170 = vadd.f32 %v160, %v166
    %v171 = vadd.f32 %v161, %v167
    %v172 = vadd.f32 %v162, %v168
    %v173 = vld [vmem:[%s3] sm:$0x1]
    %v175 = vperm.slane %v173, 0
    %v177 = vadd.f32 %v169, %v175
    %v178 = vadd.f32 %v170, %v175
    %v179 = vadd.f32 %v171, %v175
    %v180 = vadd.f32 %v172, %v175
    %v181 = vmax.f32 %v177, 0.0
    %v182 = vmax.f32 %v178, 0.0
    %v183 = vmax.f32 %v179, 0.0
    %v184 = vmax.f32 %v180, 0.0
    %v185 = vpack.c.bf16 %v182, %v181
    %v186 = vpack.c.bf16 %v184, %v183
    %v187 = vld [vmem:[%s4] sm:$0xf]
    %v188 = vld [vmem:[%s4 + $0x4] sm:$0xf]
    %v189 = vld [vmem:[%s4 + $0x8] sm:$0xf]
    %v190 = vld [vmem:[%s4 + $0xc] sm:$0xf]
    %v191 = vld [vmem:[%s5] sm:$0x1]
    %v193 = vperm.slane %v191, 0
    %v199 = vunpack.c.l.b16 %v187
    %v200 = vunpack.c.l.b16 %v188
    %v201 = vunpack.c.l.b16 %v189
    %v202 = vunpack.c.l.b16 %v190
    %v203 = vpack.c.b16 %v200, %v199
    %v204 = vpack.c.b16 %v202, %v201
    %v208 = vsel %vm52, %v185, 0
    %v211 = vsel %vm52, %v186, 0
    %213 = vmatpush.bf16.msra.mxu0 0
    %214 = vmatpush.bf16.msra.mxu0 0
    %215 = vmatpush.bf16.msra.mxu0 0
    %216 = vmatpush.bf16.msra.mxu0 0
    %217 = vmatpush.bf16.msra.mxu0 0
    %218 = vmatpush.bf16.msra.mxu0 0
    %219 = vmatpush.bf16.msra.mxu0 %v204
    %220 = vmatpush.bf16.msra.mxu0 %v203
    %221 = vmatmul.bf16.gmra.mxu0 %v208
    %v222 = vpop.f32.mrf.mxu0
    %v223 = vadd.f32 %v193, %v222
    %v224 = vpop.f32.mrf.mxu0
    %v225 = vadd.f32 %v193, %v224
    %226 = vmatmul.bf16.gmra.mxu0 %v211
    %v227 = vpop.f32.mrf.mxu0
    %v228 = vadd.f32 %v193, %v227
    %v229 = vpop.f32.mrf.mxu0
    %v230 = vadd.f32 %v193, %v229
    %231 = vdwg.mxu0
    %v232 = vmax.f32 %v223, 0.0
    %v233 = vmax.f32 %v225, 0.0
    %v234 = vmax.f32 %v228, 0.0
    %v235 = vmax.f32 %v230, 0.0
    %v236 = vld [vmem:[%s1] sm:$0x1]
    %v237 = vld [vmem:[%s1 + $0x1] sm:$0x1]
    %v238 = vld [vmem:[%s1 + $0x2] sm:$0x1]
    %v239 = vld [vmem:[%s1 + $0x3] sm:$0x1]
    %v240 = vperm.slane %v236, 0
    %v241 = vperm.slane %v237, 0
    %v242 = vperm.slane %v238, 0
    %v243 = vperm.slane %v239, 0
    %244 = vset.pattern.permute.xlu0 0
    %245 = vperm.xlu0 %244, %v240
    %v246 = vpop.permute.xlu0 %245
    %247 = vset.pattern.permute.xlu0 0
    %248 = vperm.xlu0 %247, %v241
    %v249 = vpop.permute.xlu0 %248
    %250 = vset.pattern.permute.xlu0 0
    %251 = vperm.xlu0 %250, %v242
    %v252 = vpop.permute.xlu0 %251
    %253 = vset.pattern.permute.xlu0 0
    %254 = vperm.xlu0 %253, %v243
    %v255 = vpop.permute.xlu0 %254
    %vm256 = vcmp.lt.s32.totalorder %v114, %v246
    %vm257 = vcmp.lt.s32.totalorder %v114, %v249
    %vm258 = vcmp.lt.s32.totalorder %v114, %v252
    %vm259 = vcmp.lt.s32.totalorder %v114, %v255
    %v260 = vsel %vm256, %v232, -1e+18
    %v261 = vsel %vm257, %v233, -1e+18
    %v262 = vsel %vm258, %v234, -1e+18
    %v263 = vsel %vm259, %v235, -1e+18
    %vm264 = vcmask 130048
    %v265 = vsel %vm264, %v260, -inf
    %266 = vmax.xlane.f32.xlu0 %v265
    %v267 = vpop.xlane.xlu0 %266
    %v268 = vsel %vm264, %v261, -inf
    %269 = vmax.xlane.f32.xlu0 %v268
    %v270 = vpop.xlane.xlu0 %269
    %v271 = vsel %vm264, %v262, -inf
    %272 = vmax.xlane.f32.xlu0 %v271
    %v273 = vpop.xlane.xlu0 %272
    %v274 = vsel %vm264, %v263, -inf
    %275 = vmax.xlane.f32.xlu0 %v274
    %v276 = vpop.xlane.xlu0 %275
    %v277 = vsub.f32 %v260, %v267
    %v278 = vsub.f32 %v261, %v270
    %v279 = vsub.f32 %v262, %v273
    %v280 = vsub.f32 %v263, %v276
    %v281 = vmul.f32 %v277, 1.442695
    %v282 = vpow.pop %v281
    %v283 = vmul.f32 %v278, 1.442695
    %v284 = vpow.pop %v283
    %v285 = vmul.f32 %v279, 1.442695
    %v286 = vpow.pop %v285
    %v287 = vmul.f32 %v280, 1.442695
    %v288 = vpow.pop %v287
    %v289 = vsel %vm264, %v282, 0.0
    %290 = vadd.xlane.f32.xlu0 %v289
    %v291 = vpop.xlane.xlu0 %290
    %v292 = vsel %vm264, %v284, 0.0
    %293 = vadd.xlane.f32.xlu0 %v292
    %v294 = vpop.xlane.xlu0 %293
    %v295 = vsel %vm264, %v286, 0.0
    %296 = vadd.xlane.f32.xlu0 %v295
    %v297 = vpop.xlane.xlu0 %296
    %v298 = vsel %vm264, %v288, 0.0
    %299 = vadd.xlane.f32.xlu0 %v298
    %v300 = vpop.xlane.xlu0 %299
    %v301 = vrcp.pop %v291
    %v302 = vrcp.pop %v294
    %v303 = vrcp.pop %v297
    %v304 = vrcp.pop %v300
    %v305 = vmul.f32 %v282, %v301
    %v306 = vmul.f32 %v284, %v302
    %v307 = vmul.f32 %v286, %v303
    %v308 = vmul.f32 %v288, %v304
    %v309 = vsel %vm264, %v305, 0.0
    %v310 = vrot.slane %v309, 4
    %v311 = vadd.f32 %v309, %v310
    %v312 = vrot.slane %v311, 2
    %v313 = vadd.f32 %v311, %v312
    %v314 = vrot.slane %v313, 1
    %v315 = vadd.f32 %v313, %v314
    %v316 = vsel %vm264, %v306, 0.0
    %v317 = vrot.slane %v316, 4
    %v318 = vadd.f32 %v316, %v317
    %v319 = vrot.slane %v318, 2
    %v320 = vadd.f32 %v318, %v319
    %v321 = vrot.slane %v320, 1
    %v322 = vadd.f32 %v320, %v321
    %v323 = vsel %vm264, %v307, 0.0
    %v324 = vrot.slane %v323, 4
    %v325 = vadd.f32 %v323, %v324
    %v326 = vrot.slane %v325, 2
    %v327 = vadd.f32 %v325, %v326
    %v328 = vrot.slane %v327, 1
    %v329 = vadd.f32 %v327, %v328
    %v330 = vsel %vm264, %v308, 0.0
    %v331 = vrot.slane %v330, 4
    %v332 = vadd.f32 %v330, %v331
    %v333 = vrot.slane %v332, 2
    %v334 = vadd.f32 %v332, %v333
    %v335 = vrot.slane %v334, 1
    %v336 = vadd.f32 %v334, %v335
    %338 = vset.pattern.permute.xlu0 0
    %339 = vperm.xlu0 %338, %v305
    %v340 = vpop.permute.xlu0 %339
    %343 = vset.pattern.permute.xlu0 0
    %344 = vperm.xlu0 %343, %v306
    %v345 = vpop.permute.xlu0 %344
    %348 = vset.pattern.permute.xlu0 0
    %349 = vperm.xlu0 %348, %v307
    %v350 = vpop.permute.xlu0 %349
    %353 = vset.pattern.permute.xlu0 0
    %354 = vperm.xlu0 %353, %v308
    %v355 = vpop.permute.xlu0 %354
    %v357 = vmul.f32 %v340, %v109
    %v358 = vmul.f32 %v345, %v110
    %v359 = vmul.f32 %v350, %v111
    %v360 = vmul.f32 %v355, %v112
    %v361 = vsel %vm52, %v357, 0.0
    %v362 = vrot.slane %v361, 4
    %v363 = vadd.f32 %v361, %v362
    %v364 = vrot.slane %v363, 2
    %v365 = vadd.f32 %v363, %v364
    %v366 = vrot.slane %v365, 1
    %v367 = vadd.f32 %v365, %v366
    %v368 = vsel %vm52, %v358, 0.0
    %v369 = vrot.slane %v368, 4
    %v370 = vadd.f32 %v368, %v369
    %v371 = vrot.slane %v370, 2
    %v372 = vadd.f32 %v370, %v371
    %v373 = vrot.slane %v372, 1
    %v374 = vadd.f32 %v372, %v373
    %v375 = vsel %vm52, %v359, 0.0
    %v376 = vrot.slane %v375, 4
    %v377 = vadd.f32 %v375, %v376
    %v378 = vrot.slane %v377, 2
    %v379 = vadd.f32 %v377, %v378
    %v380 = vrot.slane %v379, 1
    %v381 = vadd.f32 %v379, %v380
    %v382 = vsel %vm52, %v360, 0.0
    %v383 = vrot.slane %v382, 4
    %v384 = vadd.f32 %v382, %v383
    %v385 = vrot.slane %v384, 2
    %v386 = vadd.f32 %v384, %v385
    %v387 = vrot.slane %v386, 1
    %v388 = vadd.f32 %v386, %v387
    %v389 = vld [vmem:[%s6] sm:$0x1]
    %391 = vset.pattern.permute.xlu0 0
    %392 = vperm.xlu0 %391, %v315
    %v393 = vpop.permute.xlu0 %392
    %396 = vset.pattern.permute.xlu0 0
    %397 = vperm.xlu0 %396, %v322
    %v398 = vpop.permute.xlu0 %397
    %401 = vset.pattern.permute.xlu0 0
    %402 = vperm.xlu0 %401, %v329
    %v403 = vpop.permute.xlu0 %402
    %406 = vset.pattern.permute.xlu0 0
    %407 = vperm.xlu0 %406, %v336
    %v408 = vpop.permute.xlu0 %407
    %v410 = vperm.slane %v389, 0
    %v411 = vmul.f32 %v393, %v410
    %v412 = vmul.f32 %v398, %v410
    %v413 = vmul.f32 %v403, %v410
    %v414 = vmul.f32 %v408, %v410
    %v415 = vsub.f32 %v367, %v411
    %v416 = vsub.f32 %v374, %v412
    %v417 = vsub.f32 %v381, %v413
    %v418 = vsub.f32 %v388, %v414
    %v419 = vmul.f32 %v415, %v415
    %v420 = vmul.f32 %v416, %v416
    %v421 = vmul.f32 %v417, %v417
    %v422 = vmul.f32 %v418, %v418
    %v427 = vrot.slane %v420, 7
    %vm428 = vcmask 1041409
    %v429 = vsel %vm428, %v427, %v419
    %v430 = vrot.slane %v421, 6
    %vm431 = vcmask 1042434
    %v432 = vsel %vm431, %v430, %v429
    %v433 = vrot.slane %v422, 5
    %vm434 = vcmask 1043459
    %v435 = vsel %vm434, %v433, %v432
    %vm437 = vcmask 257024
    %v438 = vsel %vm437, %v435, 0.0
    %439 = vadd.xlane.f32.xlu0 %v438
    %v440 = vpop.xlane.xlu0 %439
    %v441 = vmax.f32 %v440, 1e-24
    %v442 = vrsqrt.pop %v441
    %v443 = vmul.f32 %v442, %v441
    %v444 = vmul.f32 %v443, %v442
    %v445 = vmul.f32 0.5, %v444
    %v446 = vsub.f32 1.5, %v445
    %v447 = vmul.f32 %v442, %v446
    %vm448 = vweird.f32 %v441
    %vm449 = vweird.f32 %v442
    %vm450 = vmor %vm448, %vm449
    %v451 = vsel %vm450, %v442, %v447
    %v453 = vrot.slane %v451, 1
    %v454 = vrot.slane %v451, 2
    %v455 = vrot.slane %v451, 3
    %v460 = vmul.f32 %v415, %v451
    %v461 = vmul.f32 %v416, %v453
    %v462 = vmul.f32 %v417, %v454
    %v463 = vmul.f32 %v418, %v455
    %464 = vset.pattern.permute.xlu0 1
    %465 = vperm.xlu0 %464, %v305
    %v466 = vpop.permute.xlu0 %465
    %468 = vset.pattern.permute.xlu0 1
    %469 = vperm.xlu0 %468, %v306
    %v470 = vpop.permute.xlu0 %469
    %472 = vset.pattern.permute.xlu0 1
    %473 = vperm.xlu0 %472, %v307
    %v474 = vpop.permute.xlu0 %473
    %476 = vset.pattern.permute.xlu0 1
    %477 = vperm.xlu0 %476, %v308
    %v478 = vpop.permute.xlu0 %477
    %v480 = vmul.f32 %v466, %v109
    %v481 = vmul.f32 %v470, %v110
    %v482 = vmul.f32 %v474, %v111
    %v483 = vmul.f32 %v478, %v112
    %v484 = vsel %vm52, %v480, 0.0
    %v485 = vrot.slane %v484, 4
    %v486 = vadd.f32 %v484, %v485
    %v487 = vrot.slane %v486, 2
    %v488 = vadd.f32 %v486, %v487
    %v489 = vrot.slane %v488, 1
    %v490 = vadd.f32 %v488, %v489
    %v491 = vsel %vm52, %v481, 0.0
    %v492 = vrot.slane %v491, 4
    %v493 = vadd.f32 %v491, %v492
    %v494 = vrot.slane %v493, 2
    %v495 = vadd.f32 %v493, %v494
    %v496 = vrot.slane %v495, 1
    %v497 = vadd.f32 %v495, %v496
    %v498 = vsel %vm52, %v482, 0.0
    %v499 = vrot.slane %v498, 4
    %v500 = vadd.f32 %v498, %v499
    %v501 = vrot.slane %v500, 2
    %v502 = vadd.f32 %v500, %v501
    %v503 = vrot.slane %v502, 1
    %v504 = vadd.f32 %v502, %v503
    %v505 = vsel %vm52, %v483, 0.0
    %v506 = vrot.slane %v505, 4
    %v507 = vadd.f32 %v505, %v506
    %v508 = vrot.slane %v507, 2
    %v509 = vadd.f32 %v507, %v508
    %v510 = vrot.slane %v509, 1
    %v511 = vadd.f32 %v509, %v510
    %v512 = vld [vmem:[%s6 + $0x1] sm:$0x1]
    %513 = vset.pattern.permute.xlu0 1
    %514 = vperm.xlu0 %513, %v315
    %v515 = vpop.permute.xlu0 %514
    %517 = vset.pattern.permute.xlu0 1
    %518 = vperm.xlu0 %517, %v322
    %v519 = vpop.permute.xlu0 %518
    %521 = vset.pattern.permute.xlu0 1
    %522 = vperm.xlu0 %521, %v329
    %v523 = vpop.permute.xlu0 %522
    %525 = vset.pattern.permute.xlu0 1
    %526 = vperm.xlu0 %525, %v336
    %v527 = vpop.permute.xlu0 %526
    %v529 = vperm.slane %v512, 0
    %v530 = vmul.f32 %v515, %v529
    %v531 = vmul.f32 %v519, %v529
    %v532 = vmul.f32 %v523, %v529
    %v533 = vmul.f32 %v527, %v529
    %v534 = vsub.f32 %v490, %v530
    %v535 = vsub.f32 %v497, %v531
    %v536 = vsub.f32 %v504, %v532
    %v537 = vsub.f32 %v511, %v533
    %v538 = vmul.f32 %v534, %v534
    %v539 = vmul.f32 %v535, %v535
    %v540 = vmul.f32 %v536, %v536
    %v541 = vmul.f32 %v537, %v537
    %v546 = vrot.slane %v539, 7
    %v547 = vsel %vm428, %v546, %v538
    %v548 = vrot.slane %v540, 6
    %v549 = vsel %vm431, %v548, %v547
    %v550 = vrot.slane %v541, 5
    %v551 = vsel %vm434, %v550, %v549
    %v553 = vsel %vm437, %v551, 0.0
    %554 = vadd.xlane.f32.xlu0 %v553
    %v555 = vpop.xlane.xlu0 %554
    %v556 = vmax.f32 %v555, 1e-24
    %v557 = vrsqrt.pop %v556
    %v558 = vmul.f32 %v557, %v556
    %v559 = vmul.f32 %v558, %v557
    %v560 = vmul.f32 0.5, %v559
    %v561 = vsub.f32 1.5, %v560
    %v562 = vmul.f32 %v557, %v561
    %vm563 = vweird.f32 %v556
    %vm564 = vweird.f32 %v557
    %vm565 = vmor %vm563, %vm564
    %v566 = vsel %vm565, %v557, %v562
    %v568 = vrot.slane %v566, 1
    %v569 = vrot.slane %v566, 2
    %v570 = vrot.slane %v566, 3
    %v575 = vmul.f32 %v534, %v566
    %v576 = vmul.f32 %v535, %v568
    %v577 = vmul.f32 %v536, %v569
    %v578 = vmul.f32 %v537, %v570
    %579 = vset.pattern.permute.xlu0 2
    %580 = vperm.xlu0 %579, %v305
    %v581 = vpop.permute.xlu0 %580
    %583 = vset.pattern.permute.xlu0 2
    %584 = vperm.xlu0 %583, %v306
    %v585 = vpop.permute.xlu0 %584
    %587 = vset.pattern.permute.xlu0 2
    %588 = vperm.xlu0 %587, %v307
    %v589 = vpop.permute.xlu0 %588
    %591 = vset.pattern.permute.xlu0 2
    %592 = vperm.xlu0 %591, %v308
    %v593 = vpop.permute.xlu0 %592
    %v595 = vmul.f32 %v581, %v109
    %v596 = vmul.f32 %v585, %v110
    %v597 = vmul.f32 %v589, %v111
    %v598 = vmul.f32 %v593, %v112
    %v599 = vsel %vm52, %v595, 0.0
    %v600 = vrot.slane %v599, 4
    %v601 = vadd.f32 %v599, %v600
    %v602 = vrot.slane %v601, 2
    %v603 = vadd.f32 %v601, %v602
    %v604 = vrot.slane %v603, 1
    %v605 = vadd.f32 %v603, %v604
    %v606 = vsel %vm52, %v596, 0.0
    %v607 = vrot.slane %v606, 4
    %v608 = vadd.f32 %v606, %v607
    %v609 = vrot.slane %v608, 2
    %v610 = vadd.f32 %v608, %v609
    %v611 = vrot.slane %v610, 1
    %v612 = vadd.f32 %v610, %v611
    %v613 = vsel %vm52, %v597, 0.0
    %v614 = vrot.slane %v613, 4
    %v615 = vadd.f32 %v613, %v614
    %v616 = vrot.slane %v615, 2
    %v617 = vadd.f32 %v615, %v616
    %v618 = vrot.slane %v617, 1
    %v619 = vadd.f32 %v617, %v618
    %v620 = vsel %vm52, %v598, 0.0
    %v621 = vrot.slane %v620, 4
    %v622 = vadd.f32 %v620, %v621
    %v623 = vrot.slane %v622, 2
    %v624 = vadd.f32 %v622, %v623
    %v625 = vrot.slane %v624, 1
    %v626 = vadd.f32 %v624, %v625
    %v627 = vld [vmem:[%s6 + $0x2] sm:$0x1]
    %628 = vset.pattern.permute.xlu0 2
    %629 = vperm.xlu0 %628, %v315
    %v630 = vpop.permute.xlu0 %629
    %632 = vset.pattern.permute.xlu0 2
    %633 = vperm.xlu0 %632, %v322
    %v634 = vpop.permute.xlu0 %633
    %636 = vset.pattern.permute.xlu0 2
    %637 = vperm.xlu0 %636, %v329
    %v638 = vpop.permute.xlu0 %637
    %640 = vset.pattern.permute.xlu0 2
    %641 = vperm.xlu0 %640, %v336
    %v642 = vpop.permute.xlu0 %641
    %v644 = vperm.slane %v627, 0
    %v645 = vmul.f32 %v630, %v644
    %v646 = vmul.f32 %v634, %v644
    %v647 = vmul.f32 %v638, %v644
    %v648 = vmul.f32 %v642, %v644
    %v649 = vsub.f32 %v605, %v645
    %v650 = vsub.f32 %v612, %v646
    %v651 = vsub.f32 %v619, %v647
    %v652 = vsub.f32 %v626, %v648
    %v653 = vmul.f32 %v649, %v649
    %v654 = vmul.f32 %v650, %v650
    %v655 = vmul.f32 %v651, %v651
    %v656 = vmul.f32 %v652, %v652
    %v661 = vrot.slane %v654, 7
    %v662 = vsel %vm428, %v661, %v653
    %v663 = vrot.slane %v655, 6
    %v664 = vsel %vm431, %v663, %v662
    %v665 = vrot.slane %v656, 5
    %v666 = vsel %vm434, %v665, %v664
    %v668 = vsel %vm437, %v666, 0.0
    %669 = vadd.xlane.f32.xlu0 %v668
    %v670 = vpop.xlane.xlu0 %669
    %v671 = vmax.f32 %v670, 1e-24
    %v672 = vrsqrt.pop %v671
    %v673 = vmul.f32 %v672, %v671
    %v674 = vmul.f32 %v673, %v672
    %v675 = vmul.f32 0.5, %v674
    %v676 = vsub.f32 1.5, %v675
    %v677 = vmul.f32 %v672, %v676
    %vm678 = vweird.f32 %v671
    %vm679 = vweird.f32 %v672
    %vm680 = vmor %vm678, %vm679
    %v681 = vsel %vm680, %v672, %v677
    %v683 = vrot.slane %v681, 1
    %v684 = vrot.slane %v681, 2
    %v685 = vrot.slane %v681, 3
    %v690 = vmul.f32 %v649, %v681
    %v691 = vmul.f32 %v650, %v683
    %v692 = vmul.f32 %v651, %v684
    %v693 = vmul.f32 %v652, %v685
    %694 = vset.pattern.permute.xlu0 3
    %695 = vperm.xlu0 %694, %v305
    %v696 = vpop.permute.xlu0 %695
    %698 = vset.pattern.permute.xlu0 3
    %699 = vperm.xlu0 %698, %v306
    %v700 = vpop.permute.xlu0 %699
    %702 = vset.pattern.permute.xlu0 3
    %703 = vperm.xlu0 %702, %v307
    %v704 = vpop.permute.xlu0 %703
    %706 = vset.pattern.permute.xlu0 3
    %707 = vperm.xlu0 %706, %v308
    %v708 = vpop.permute.xlu0 %707
    %v710 = vmul.f32 %v696, %v109
    %v711 = vmul.f32 %v700, %v110
    %v712 = vmul.f32 %v704, %v111
    %v713 = vmul.f32 %v708, %v112
    %v714 = vsel %vm52, %v710, 0.0
    %v715 = vrot.slane %v714, 4
    %v716 = vadd.f32 %v714, %v715
    %v717 = vrot.slane %v716, 2
    %v718 = vadd.f32 %v716, %v717
    %v719 = vrot.slane %v718, 1
    %v720 = vadd.f32 %v718, %v719
    %v721 = vsel %vm52, %v711, 0.0
    %v722 = vrot.slane %v721, 4
    %v723 = vadd.f32 %v721, %v722
    %v724 = vrot.slane %v723, 2
    %v725 = vadd.f32 %v723, %v724
    %v726 = vrot.slane %v725, 1
    %v727 = vadd.f32 %v725, %v726
    %v728 = vsel %vm52, %v712, 0.0
    %v729 = vrot.slane %v728, 4
    %v730 = vadd.f32 %v728, %v729
    %v731 = vrot.slane %v730, 2
    %v732 = vadd.f32 %v730, %v731
    %v733 = vrot.slane %v732, 1
    %v734 = vadd.f32 %v732, %v733
    %v735 = vsel %vm52, %v713, 0.0
    %v736 = vrot.slane %v735, 4
    %v737 = vadd.f32 %v735, %v736
    %v738 = vrot.slane %v737, 2
    %v739 = vadd.f32 %v737, %v738
    %v740 = vrot.slane %v739, 1
    %v741 = vadd.f32 %v739, %v740
    %v742 = vld [vmem:[%s6 + $0x3] sm:$0x1]
    %743 = vset.pattern.permute.xlu0 3
    %744 = vperm.xlu0 %743, %v315
    %v745 = vpop.permute.xlu0 %744
    %747 = vset.pattern.permute.xlu0 3
    %748 = vperm.xlu0 %747, %v322
    %v749 = vpop.permute.xlu0 %748
    %751 = vset.pattern.permute.xlu0 3
    %752 = vperm.xlu0 %751, %v329
    %v753 = vpop.permute.xlu0 %752
    %755 = vset.pattern.permute.xlu0 3
    %756 = vperm.xlu0 %755, %v336
    %v757 = vpop.permute.xlu0 %756
    %v759 = vperm.slane %v742, 0
    %v760 = vmul.f32 %v745, %v759
    %v761 = vmul.f32 %v749, %v759
    %v762 = vmul.f32 %v753, %v759
    %v763 = vmul.f32 %v757, %v759
    %v764 = vsub.f32 %v720, %v760
    %v765 = vsub.f32 %v727, %v761
    %v766 = vsub.f32 %v734, %v762
    %v767 = vsub.f32 %v741, %v763
    %v768 = vmul.f32 %v764, %v764
    %v769 = vmul.f32 %v765, %v765
    %v770 = vmul.f32 %v766, %v766
    %v771 = vmul.f32 %v767, %v767
    %v776 = vrot.slane %v769, 7
    %v777 = vsel %vm428, %v776, %v768
    %v778 = vrot.slane %v770, 6
    %v779 = vsel %vm431, %v778, %v777
    %v780 = vrot.slane %v771, 5
    %v781 = vsel %vm434, %v780, %v779
    %v783 = vsel %vm437, %v781, 0.0
    %784 = vadd.xlane.f32.xlu0 %v783
    %v785 = vpop.xlane.xlu0 %784
    %v786 = vmax.f32 %v785, 1e-24
    %v787 = vrsqrt.pop %v786
    %v788 = vmul.f32 %v787, %v786
    %v789 = vmul.f32 %v788, %v787
    %v790 = vmul.f32 0.5, %v789
    %v791 = vsub.f32 1.5, %v790
    %v792 = vmul.f32 %v787, %v791
    %vm793 = vweird.f32 %v786
    %vm794 = vweird.f32 %v787
    %vm795 = vmor %vm793, %vm794
    %v796 = vsel %vm795, %v787, %v792
    %v798 = vrot.slane %v796, 1
    %v799 = vrot.slane %v796, 2
    %v800 = vrot.slane %v796, 3
    %v805 = vmul.f32 %v764, %v796
    %v806 = vmul.f32 %v765, %v798
    %v807 = vmul.f32 %v766, %v799
    %v808 = vmul.f32 %v767, %v800
    %809 = vset.pattern.permute.xlu0 4
    %810 = vperm.xlu0 %809, %v305
    %v811 = vpop.permute.xlu0 %810
    %813 = vset.pattern.permute.xlu0 4
    %814 = vperm.xlu0 %813, %v306
    %v815 = vpop.permute.xlu0 %814
    %817 = vset.pattern.permute.xlu0 4
    %818 = vperm.xlu0 %817, %v307
    %v819 = vpop.permute.xlu0 %818
    %821 = vset.pattern.permute.xlu0 4
    %822 = vperm.xlu0 %821, %v308
    %v823 = vpop.permute.xlu0 %822
    %v825 = vmul.f32 %v811, %v109
    %v826 = vmul.f32 %v815, %v110
    %v827 = vmul.f32 %v819, %v111
    %v828 = vmul.f32 %v823, %v112
    %v829 = vsel %vm52, %v825, 0.0
    %v830 = vrot.slane %v829, 4
    %v831 = vadd.f32 %v829, %v830
    %v832 = vrot.slane %v831, 2
    %v833 = vadd.f32 %v831, %v832
    %v834 = vrot.slane %v833, 1
    %v835 = vadd.f32 %v833, %v834
    %v836 = vsel %vm52, %v826, 0.0
    %v837 = vrot.slane %v836, 4
    %v838 = vadd.f32 %v836, %v837
    %v839 = vrot.slane %v838, 2
    %v840 = vadd.f32 %v838, %v839
    %v841 = vrot.slane %v840, 1
    %v842 = vadd.f32 %v840, %v841
    %v843 = vsel %vm52, %v827, 0.0
    %v844 = vrot.slane %v843, 4
    %v845 = vadd.f32 %v843, %v844
    %v846 = vrot.slane %v845, 2
    %v847 = vadd.f32 %v845, %v846
    %v848 = vrot.slane %v847, 1
    %v849 = vadd.f32 %v847, %v848
    %v850 = vsel %vm52, %v828, 0.0
    %v851 = vrot.slane %v850, 4
    %v852 = vadd.f32 %v850, %v851
    %v853 = vrot.slane %v852, 2
    %v854 = vadd.f32 %v852, %v853
    %v855 = vrot.slane %v854, 1
    %v856 = vadd.f32 %v854, %v855
    %v857 = vld [vmem:[%s6 + $0x4] sm:$0x1]
    %858 = vset.pattern.permute.xlu0 4
    %859 = vperm.xlu0 %858, %v315
    %v860 = vpop.permute.xlu0 %859
    %862 = vset.pattern.permute.xlu0 4
    %863 = vperm.xlu0 %862, %v322
    %v864 = vpop.permute.xlu0 %863
    %866 = vset.pattern.permute.xlu0 4
    %867 = vperm.xlu0 %866, %v329
    %v868 = vpop.permute.xlu0 %867
    %870 = vset.pattern.permute.xlu0 4
    %871 = vperm.xlu0 %870, %v336
    %v872 = vpop.permute.xlu0 %871
    %v874 = vperm.slane %v857, 0
    %v875 = vmul.f32 %v860, %v874
    %v876 = vmul.f32 %v864, %v874
    %v877 = vmul.f32 %v868, %v874
    %v878 = vmul.f32 %v872, %v874
    %v879 = vsub.f32 %v835, %v875
    %v880 = vsub.f32 %v842, %v876
    %v881 = vsub.f32 %v849, %v877
    %v882 = vsub.f32 %v856, %v878
    %v883 = vmul.f32 %v879, %v879
    %v884 = vmul.f32 %v880, %v880
    %v885 = vmul.f32 %v881, %v881
    %v886 = vmul.f32 %v882, %v882
    %v891 = vrot.slane %v884, 7
    %v892 = vsel %vm428, %v891, %v883
    %v893 = vrot.slane %v885, 6
    %v894 = vsel %vm431, %v893, %v892
    %v895 = vrot.slane %v886, 5
    %v896 = vsel %vm434, %v895, %v894
    %v898 = vsel %vm437, %v896, 0.0
    %899 = vadd.xlane.f32.xlu0 %v898
    %v900 = vpop.xlane.xlu0 %899
    %v901 = vmax.f32 %v900, 1e-24
    %v902 = vrsqrt.pop %v901
    %v903 = vmul.f32 %v902, %v901
    %v904 = vmul.f32 %v903, %v902
    %v905 = vmul.f32 0.5, %v904
    %v906 = vsub.f32 1.5, %v905
    %v907 = vmul.f32 %v902, %v906
    %vm908 = vweird.f32 %v901
    %vm909 = vweird.f32 %v902
    %vm910 = vmor %vm908, %vm909
    %v911 = vsel %vm910, %v902, %v907
    %v913 = vrot.slane %v911, 1
    %v914 = vrot.slane %v911, 2
    %v915 = vrot.slane %v911, 3
    %v920 = vmul.f32 %v879, %v911
    %v921 = vmul.f32 %v880, %v913
    %v922 = vmul.f32 %v881, %v914
    %v923 = vmul.f32 %v882, %v915
    %924 = vset.pattern.permute.xlu0 5
    %925 = vperm.xlu0 %924, %v305
    %v926 = vpop.permute.xlu0 %925
    %928 = vset.pattern.permute.xlu0 5
    %929 = vperm.xlu0 %928, %v306
    %v930 = vpop.permute.xlu0 %929
    %932 = vset.pattern.permute.xlu0 5
    %933 = vperm.xlu0 %932, %v307
    %v934 = vpop.permute.xlu0 %933
    %936 = vset.pattern.permute.xlu0 5
    %937 = vperm.xlu0 %936, %v308
    %v938 = vpop.permute.xlu0 %937
    %v940 = vmul.f32 %v926, %v109
    %v941 = vmul.f32 %v930, %v110
    %v942 = vmul.f32 %v934, %v111
    %v943 = vmul.f32 %v938, %v112
    %v944 = vsel %vm52, %v940, 0.0
    %v945 = vrot.slane %v944, 4
    %v946 = vadd.f32 %v944, %v945
    %v947 = vrot.slane %v946, 2
    %v948 = vadd.f32 %v946, %v947
    %v949 = vrot.slane %v948, 1
    %v950 = vadd.f32 %v948, %v949
    %v951 = vsel %vm52, %v941, 0.0
    %v952 = vrot.slane %v951, 4
    %v953 = vadd.f32 %v951, %v952
    %v954 = vrot.slane %v953, 2
    %v955 = vadd.f32 %v953, %v954
    %v956 = vrot.slane %v955, 1
    %v957 = vadd.f32 %v955, %v956
    %v958 = vsel %vm52, %v942, 0.0
    %v959 = vrot.slane %v958, 4
    %v960 = vadd.f32 %v958, %v959
    %v961 = vrot.slane %v960, 2
    %v962 = vadd.f32 %v960, %v961
    %v963 = vrot.slane %v962, 1
    %v964 = vadd.f32 %v962, %v963
    %v965 = vsel %vm52, %v943, 0.0
    %v966 = vrot.slane %v965, 4
    %v967 = vadd.f32 %v965, %v966
    %v968 = vrot.slane %v967, 2
    %v969 = vadd.f32 %v967, %v968
    %v970 = vrot.slane %v969, 1
    %v971 = vadd.f32 %v969, %v970
    %v972 = vld [vmem:[%s6 + $0x5] sm:$0x1]
    %973 = vset.pattern.permute.xlu0 5
    %974 = vperm.xlu0 %973, %v315
    %v975 = vpop.permute.xlu0 %974
    %977 = vset.pattern.permute.xlu0 5
    %978 = vperm.xlu0 %977, %v322
    %v979 = vpop.permute.xlu0 %978
    %981 = vset.pattern.permute.xlu0 5
    %982 = vperm.xlu0 %981, %v329
    %v983 = vpop.permute.xlu0 %982
    %985 = vset.pattern.permute.xlu0 5
    %986 = vperm.xlu0 %985, %v336
    %v987 = vpop.permute.xlu0 %986
    %v989 = vperm.slane %v972, 0
    %v990 = vmul.f32 %v975, %v989
    %v991 = vmul.f32 %v979, %v989
    %v992 = vmul.f32 %v983, %v989
    %v993 = vmul.f32 %v987, %v989
    %v994 = vsub.f32 %v950, %v990
    %v995 = vsub.f32 %v957, %v991
    %v996 = vsub.f32 %v964, %v992
    %v997 = vsub.f32 %v971, %v993
    %v998 = vmul.f32 %v994, %v994
    %v999 = vmul.f32 %v995, %v995
    %v1000 = vmul.f32 %v996, %v996
    %v1001 = vmul.f32 %v997, %v997
    %v1006 = vrot.slane %v999, 7
    %v1007 = vsel %vm428, %v1006, %v998
    %v1008 = vrot.slane %v1000, 6
    %v1009 = vsel %vm431, %v1008, %v1007
    %v1010 = vrot.slane %v1001, 5
    %v1011 = vsel %vm434, %v1010, %v1009
    %v1013 = vsel %vm437, %v1011, 0.0
    %1014 = vadd.xlane.f32.xlu0 %v1013
    %v1015 = vpop.xlane.xlu0 %1014
    %v1016 = vmax.f32 %v1015, 1e-24
    %v1017 = vrsqrt.pop %v1016
    %v1018 = vmul.f32 %v1017, %v1016
    %v1019 = vmul.f32 %v1018, %v1017
    %v1020 = vmul.f32 0.5, %v1019
    %v1021 = vsub.f32 1.5, %v1020
    %v1022 = vmul.f32 %v1017, %v1021
    %vm1023 = vweird.f32 %v1016
    %vm1024 = vweird.f32 %v1017
    %vm1025 = vmor %vm1023, %vm1024
    %v1026 = vsel %vm1025, %v1017, %v1022
    %v1028 = vrot.slane %v1026, 1
    %v1029 = vrot.slane %v1026, 2
    %v1030 = vrot.slane %v1026, 3
    %v1035 = vmul.f32 %v994, %v1026
    %v1036 = vmul.f32 %v995, %v1028
    %v1037 = vmul.f32 %v996, %v1029
    %v1038 = vmul.f32 %v997, %v1030
    %1039 = vset.pattern.permute.xlu0 6
    %1040 = vperm.xlu0 %1039, %v305
    %v1041 = vpop.permute.xlu0 %1040
    %1043 = vset.pattern.permute.xlu0 6
    %1044 = vperm.xlu0 %1043, %v306
    %v1045 = vpop.permute.xlu0 %1044
    %1047 = vset.pattern.permute.xlu0 6
    %1048 = vperm.xlu0 %1047, %v307
    %v1049 = vpop.permute.xlu0 %1048
    %1051 = vset.pattern.permute.xlu0 6
    %1052 = vperm.xlu0 %1051, %v308
    %v1053 = vpop.permute.xlu0 %1052
    %v1055 = vmul.f32 %v1041, %v109
    %v1056 = vmul.f32 %v1045, %v110
    %v1057 = vmul.f32 %v1049, %v111
    %v1058 = vmul.f32 %v1053, %v112
    %v1059 = vsel %vm52, %v1055, 0.0
    %v1060 = vrot.slane %v1059, 4
    %v1061 = vadd.f32 %v1059, %v1060
    %v1062 = vrot.slane %v1061, 2
    %v1063 = vadd.f32 %v1061, %v1062
    %v1064 = vrot.slane %v1063, 1
    %v1065 = vadd.f32 %v1063, %v1064
    %v1066 = vsel %vm52, %v1056, 0.0
    %v1067 = vrot.slane %v1066, 4
    %v1068 = vadd.f32 %v1066, %v1067
    %v1069 = vrot.slane %v1068, 2
    %v1070 = vadd.f32 %v1068, %v1069
    %v1071 = vrot.slane %v1070, 1
    %v1072 = vadd.f32 %v1070, %v1071
    %v1073 = vsel %vm52, %v1057, 0.0
    %v1074 = vrot.slane %v1073, 4
    %v1075 = vadd.f32 %v1073, %v1074
    %v1076 = vrot.slane %v1075, 2
    %v1077 = vadd.f32 %v1075, %v1076
    %v1078 = vrot.slane %v1077, 1
    %v1079 = vadd.f32 %v1077, %v1078
    %v1080 = vsel %vm52, %v1058, 0.0
    %v1081 = vrot.slane %v1080, 4
    %v1082 = vadd.f32 %v1080, %v1081
    %v1083 = vrot.slane %v1082, 2
    %v1084 = vadd.f32 %v1082, %v1083
    %v1085 = vrot.slane %v1084, 1
    %v1086 = vadd.f32 %v1084, %v1085
    %v1087 = vld [vmem:[%s6 + $0x6] sm:$0x1]
    %1088 = vset.pattern.permute.xlu0 6
    %1089 = vperm.xlu0 %1088, %v315
    %v1090 = vpop.permute.xlu0 %1089
    %1092 = vset.pattern.permute.xlu0 6
    %1093 = vperm.xlu0 %1092, %v322
    %v1094 = vpop.permute.xlu0 %1093
    %1096 = vset.pattern.permute.xlu0 6
    %1097 = vperm.xlu0 %1096, %v329
    %v1098 = vpop.permute.xlu0 %1097
    %1100 = vset.pattern.permute.xlu0 6
    %1101 = vperm.xlu0 %1100, %v336
    %v1102 = vpop.permute.xlu0 %1101
    %v1104 = vperm.slane %v1087, 0
    %v1105 = vmul.f32 %v1090, %v1104
    %v1106 = vmul.f32 %v1094, %v1104
    %v1107 = vmul.f32 %v1098, %v1104
    %v1108 = vmul.f32 %v1102, %v1104
    %v1109 = vsub.f32 %v1065, %v1105
    %v1110 = vsub.f32 %v1072, %v1106
    %v1111 = vsub.f32 %v1079, %v1107
    %v1112 = vsub.f32 %v1086, %v1108
    %v1113 = vmul.f32 %v1109, %v1109
    %v1114 = vmul.f32 %v1110, %v1110
    %v1115 = vmul.f32 %v1111, %v1111
    %v1116 = vmul.f32 %v1112, %v1112
    %v1121 = vrot.slane %v1114, 7
    %v1122 = vsel %vm428, %v1121, %v1113
    %v1123 = vrot.slane %v1115, 6
    %v1124 = vsel %vm431, %v1123, %v1122
    %v1125 = vrot.slane %v1116, 5
    %v1126 = vsel %vm434, %v1125, %v1124
    %v1128 = vsel %vm437, %v1126, 0.0
    %1129 = vadd.xlane.f32.xlu0 %v1128
    %v1130 = vpop.xlane.xlu0 %1129
    %v1131 = vmax.f32 %v1130, 1e-24
    %v1132 = vrsqrt.pop %v1131
    %v1133 = vmul.f32 %v1132, %v1131
    %v1134 = vmul.f32 %v1133, %v1132
    %v1135 = vmul.f32 0.5, %v1134
    %v1136 = vsub.f32 1.5, %v1135
    %v1137 = vmul.f32 %v1132, %v1136
    %vm1138 = vweird.f32 %v1131
    %vm1139 = vweird.f32 %v1132
    %vm1140 = vmor %vm1138, %vm1139
    %v1141 = vsel %vm1140, %v1132, %v1137
    %v1143 = vrot.slane %v1141, 1
    %v1144 = vrot.slane %v1141, 2
    %v1145 = vrot.slane %v1141, 3
    %v1150 = vmul.f32 %v1109, %v1141
    %v1151 = vmul.f32 %v1110, %v1143
    %v1152 = vmul.f32 %v1111, %v1144
    %v1153 = vmul.f32 %v1112, %v1145
    %1154 = vset.pattern.permute.xlu0 7
    %1155 = vperm.xlu0 %1154, %v305
    %v1156 = vpop.permute.xlu0 %1155
    %1158 = vset.pattern.permute.xlu0 7
    %1159 = vperm.xlu0 %1158, %v306
    %v1160 = vpop.permute.xlu0 %1159
    %1162 = vset.pattern.permute.xlu0 7
    %1163 = vperm.xlu0 %1162, %v307
    %v1164 = vpop.permute.xlu0 %1163
    %1166 = vset.pattern.permute.xlu0 7
    %1167 = vperm.xlu0 %1166, %v308
    %v1168 = vpop.permute.xlu0 %1167
    %v1170 = vmul.f32 %v1156, %v109
    %v1171 = vmul.f32 %v1160, %v110
    %v1172 = vmul.f32 %v1164, %v111
    %v1173 = vmul.f32 %v1168, %v112
    %v1174 = vsel %vm52, %v1170, 0.0
    %v1175 = vrot.slane %v1174, 4
    %v1176 = vadd.f32 %v1174, %v1175
    %v1177 = vrot.slane %v1176, 2
    %v1178 = vadd.f32 %v1176, %v1177
    %v1179 = vrot.slane %v1178, 1
    %v1180 = vadd.f32 %v1178, %v1179
    %v1181 = vsel %vm52, %v1171, 0.0
    %v1182 = vrot.slane %v1181, 4
    %v1183 = vadd.f32 %v1181, %v1182
    %v1184 = vrot.slane %v1183, 2
    %v1185 = vadd.f32 %v1183, %v1184
    %v1186 = vrot.slane %v1185, 1
    %v1187 = vadd.f32 %v1185, %v1186
    %v1188 = vsel %vm52, %v1172, 0.0
    %v1189 = vrot.slane %v1188, 4
    %v1190 = vadd.f32 %v1188, %v1189
    %v1191 = vrot.slane %v1190, 2
    %v1192 = vadd.f32 %v1190, %v1191
    %v1193 = vrot.slane %v1192, 1
    %v1194 = vadd.f32 %v1192, %v1193
    %v1195 = vsel %vm52, %v1173, 0.0
    %v1196 = vrot.slane %v1195, 4
    %v1197 = vadd.f32 %v1195, %v1196
    %v1198 = vrot.slane %v1197, 2
    %v1199 = vadd.f32 %v1197, %v1198
    %v1200 = vrot.slane %v1199, 1
    %v1201 = vadd.f32 %v1199, %v1200
    %v1202 = vld [vmem:[%s6 + $0x7] sm:$0x1]
    %1203 = vset.pattern.permute.xlu0 7
    %1204 = vperm.xlu0 %1203, %v315
    %v1205 = vpop.permute.xlu0 %1204
    %1207 = vset.pattern.permute.xlu0 7
    %1208 = vperm.xlu0 %1207, %v322
    %v1209 = vpop.permute.xlu0 %1208
    %1211 = vset.pattern.permute.xlu0 7
    %1212 = vperm.xlu0 %1211, %v329
    %v1213 = vpop.permute.xlu0 %1212
    %1215 = vset.pattern.permute.xlu0 7
    %1216 = vperm.xlu0 %1215, %v336
    %v1217 = vpop.permute.xlu0 %1216
    %v1219 = vperm.slane %v1202, 0
    %v1220 = vmul.f32 %v1205, %v1219
    %v1221 = vmul.f32 %v1209, %v1219
    %v1222 = vmul.f32 %v1213, %v1219
    %v1223 = vmul.f32 %v1217, %v1219
    %v1224 = vsub.f32 %v1180, %v1220
    %v1225 = vsub.f32 %v1187, %v1221
    %v1226 = vsub.f32 %v1194, %v1222
    %v1227 = vsub.f32 %v1201, %v1223
    %v1228 = vmul.f32 %v1224, %v1224
    %v1229 = vmul.f32 %v1225, %v1225
    %v1230 = vmul.f32 %v1226, %v1226
    %v1231 = vmul.f32 %v1227, %v1227
    %v1236 = vrot.slane %v1229, 7
    %v1237 = vsel %vm428, %v1236, %v1228
    %v1238 = vrot.slane %v1230, 6
    %v1239 = vsel %vm431, %v1238, %v1237
    %v1240 = vrot.slane %v1231, 5
    %v1241 = vsel %vm434, %v1240, %v1239
    %v1243 = vsel %vm437, %v1241, 0.0
    %1244 = vadd.xlane.f32.xlu0 %v1243
    %v1245 = vpop.xlane.xlu0 %1244
    %v1246 = vmax.f32 %v1245, 1e-24
    %v1247 = vrsqrt.pop %v1246
    %v1248 = vmul.f32 %v1247, %v1246
    %v1249 = vmul.f32 %v1248, %v1247
    %v1250 = vmul.f32 0.5, %v1249
    %v1251 = vsub.f32 1.5, %v1250
    %v1252 = vmul.f32 %v1247, %v1251
    %vm1253 = vweird.f32 %v1246
    %vm1254 = vweird.f32 %v1247
    %vm1255 = vmor %vm1253, %vm1254
    %v1256 = vsel %vm1255, %v1247, %v1252
    %v1258 = vrot.slane %v1256, 1
    %v1259 = vrot.slane %v1256, 2
    %v1260 = vrot.slane %v1256, 3
    %v1265 = vmul.f32 %v1224, %v1256
    %v1266 = vmul.f32 %v1225, %v1258
    %v1267 = vmul.f32 %v1226, %v1259
    %v1268 = vmul.f32 %v1227, %v1260
    %1269 = vset.pattern.permute.xlu0 8
    %1270 = vperm.xlu0 %1269, %v305
    %v1271 = vpop.permute.xlu0 %1270
    %1273 = vset.pattern.permute.xlu0 8
    %1274 = vperm.xlu0 %1273, %v306
    %v1275 = vpop.permute.xlu0 %1274
    %1277 = vset.pattern.permute.xlu0 8
    %1278 = vperm.xlu0 %1277, %v307
    %v1279 = vpop.permute.xlu0 %1278
    %1281 = vset.pattern.permute.xlu0 8
    %1282 = vperm.xlu0 %1281, %v308
    %v1283 = vpop.permute.xlu0 %1282
    %v1285 = vmul.f32 %v1271, %v109
    %v1286 = vmul.f32 %v1275, %v110
    %v1287 = vmul.f32 %v1279, %v111
    %v1288 = vmul.f32 %v1283, %v112
    %v1289 = vsel %vm52, %v1285, 0.0
    %v1290 = vrot.slane %v1289, 4
    %v1291 = vadd.f32 %v1289, %v1290
    %v1292 = vrot.slane %v1291, 2
    %v1293 = vadd.f32 %v1291, %v1292
    %v1294 = vrot.slane %v1293, 1
    %v1295 = vadd.f32 %v1293, %v1294
    %v1296 = vsel %vm52, %v1286, 0.0
    %v1297 = vrot.slane %v1296, 4
    %v1298 = vadd.f32 %v1296, %v1297
    %v1299 = vrot.slane %v1298, 2
    %v1300 = vadd.f32 %v1298, %v1299
    %v1301 = vrot.slane %v1300, 1
    %v1302 = vadd.f32 %v1300, %v1301
    %v1303 = vsel %vm52, %v1287, 0.0
    %v1304 = vrot.slane %v1303, 4
    %v1305 = vadd.f32 %v1303, %v1304
    %v1306 = vrot.slane %v1305, 2
    %v1307 = vadd.f32 %v1305, %v1306
    %v1308 = vrot.slane %v1307, 1
    %v1309 = vadd.f32 %v1307, %v1308
    %v1310 = vsel %vm52, %v1288, 0.0
    %v1311 = vrot.slane %v1310, 4
    %v1312 = vadd.f32 %v1310, %v1311
    %v1313 = vrot.slane %v1312, 2
    %v1314 = vadd.f32 %v1312, %v1313
    %v1315 = vrot.slane %v1314, 1
    %v1316 = vadd.f32 %v1314, %v1315
    %v1317 = vld [vmem:[%s6 + $0x8] sm:$0x1]
    %1318 = vset.pattern.permute.xlu0 8
    %1319 = vperm.xlu0 %1318, %v315
    %v1320 = vpop.permute.xlu0 %1319
    %1322 = vset.pattern.permute.xlu0 8
    %1323 = vperm.xlu0 %1322, %v322
    %v1324 = vpop.permute.xlu0 %1323
    %1326 = vset.pattern.permute.xlu0 8
    %1327 = vperm.xlu0 %1326, %v329
    %v1328 = vpop.permute.xlu0 %1327
    %1330 = vset.pattern.permute.xlu0 8
    %1331 = vperm.xlu0 %1330, %v336
    %v1332 = vpop.permute.xlu0 %1331
    %v1334 = vperm.slane %v1317, 0
    %v1335 = vmul.f32 %v1320, %v1334
    %v1336 = vmul.f32 %v1324, %v1334
    %v1337 = vmul.f32 %v1328, %v1334
    %v1338 = vmul.f32 %v1332, %v1334
    %v1339 = vsub.f32 %v1295, %v1335
    %v1340 = vsub.f32 %v1302, %v1336
    %v1341 = vsub.f32 %v1309, %v1337
    %v1342 = vsub.f32 %v1316, %v1338
    %v1343 = vmul.f32 %v1339, %v1339
    %v1344 = vmul.f32 %v1340, %v1340
    %v1345 = vmul.f32 %v1341, %v1341
    %v1346 = vmul.f32 %v1342, %v1342
    %v1351 = vrot.slane %v1344, 7
    %v1352 = vsel %vm428, %v1351, %v1343
    %v1353 = vrot.slane %v1345, 6
    %v1354 = vsel %vm431, %v1353, %v1352
    %v1355 = vrot.slane %v1346, 5
    %v1356 = vsel %vm434, %v1355, %v1354
    %v1358 = vsel %vm437, %v1356, 0.0
    %1359 = vadd.xlane.f32.xlu0 %v1358
    %v1360 = vpop.xlane.xlu0 %1359
    %v1361 = vmax.f32 %v1360, 1e-24
    %v1362 = vrsqrt.pop %v1361
    %v1363 = vmul.f32 %v1362, %v1361
    %v1364 = vmul.f32 %v1363, %v1362
    %v1365 = vmul.f32 0.5, %v1364
    %v1366 = vsub.f32 1.5, %v1365
    %v1367 = vmul.f32 %v1362, %v1366
    %vm1368 = vweird.f32 %v1361
    %vm1369 = vweird.f32 %v1362
    %vm1370 = vmor %vm1368, %vm1369
    %v1371 = vsel %vm1370, %v1362, %v1367
    %v1373 = vrot.slane %v1371, 1
    %v1374 = vrot.slane %v1371, 2
    %v1375 = vrot.slane %v1371, 3
    %v1380 = vmul.f32 %v1339, %v1371
    %v1381 = vmul.f32 %v1340, %v1373
    %v1382 = vmul.f32 %v1341, %v1374
    %v1383 = vmul.f32 %v1342, %v1375
    %1384 = vset.pattern.permute.xlu0 9
    %1385 = vperm.xlu0 %1384, %v305
    %v1386 = vpop.permute.xlu0 %1385
    %1388 = vset.pattern.permute.xlu0 9
    %1389 = vperm.xlu0 %1388, %v306
    %v1390 = vpop.permute.xlu0 %1389
    %1392 = vset.pattern.permute.xlu0 9
    %1393 = vperm.xlu0 %1392, %v307
    %v1394 = vpop.permute.xlu0 %1393
    %1396 = vset.pattern.permute.xlu0 9
    %1397 = vperm.xlu0 %1396, %v308
    %v1398 = vpop.permute.xlu0 %1397
    %v1400 = vmul.f32 %v1386, %v109
    %v1401 = vmul.f32 %v1390, %v110
    %v1402 = vmul.f32 %v1394, %v111
    %v1403 = vmul.f32 %v1398, %v112
    %v1404 = vsel %vm52, %v1400, 0.0
    %v1405 = vrot.slane %v1404, 4
    %v1406 = vadd.f32 %v1404, %v1405
    %v1407 = vrot.slane %v1406, 2
    %v1408 = vadd.f32 %v1406, %v1407
    %v1409 = vrot.slane %v1408, 1
    %v1410 = vadd.f32 %v1408, %v1409
    %v1411 = vsel %vm52, %v1401, 0.0
    %v1412 = vrot.slane %v1411, 4
    %v1413 = vadd.f32 %v1411, %v1412
    %v1414 = vrot.slane %v1413, 2
    %v1415 = vadd.f32 %v1413, %v1414
    %v1416 = vrot.slane %v1415, 1
    %v1417 = vadd.f32 %v1415, %v1416
    %v1418 = vsel %vm52, %v1402, 0.0
    %v1419 = vrot.slane %v1418, 4
    %v1420 = vadd.f32 %v1418, %v1419
    %v1421 = vrot.slane %v1420, 2
    %v1422 = vadd.f32 %v1420, %v1421
    %v1423 = vrot.slane %v1422, 1
    %v1424 = vadd.f32 %v1422, %v1423
    %v1425 = vsel %vm52, %v1403, 0.0
    %v1426 = vrot.slane %v1425, 4
    %v1427 = vadd.f32 %v1425, %v1426
    %v1428 = vrot.slane %v1427, 2
    %v1429 = vadd.f32 %v1427, %v1428
    %v1430 = vrot.slane %v1429, 1
    %v1431 = vadd.f32 %v1429, %v1430
    %v1432 = vld [vmem:[%s6 + $0x9] sm:$0x1]
    %1433 = vset.pattern.permute.xlu0 9
    %1434 = vperm.xlu0 %1433, %v315
    %v1435 = vpop.permute.xlu0 %1434
    %1437 = vset.pattern.permute.xlu0 9
    %1438 = vperm.xlu0 %1437, %v322
    %v1439 = vpop.permute.xlu0 %1438
    %1441 = vset.pattern.permute.xlu0 9
    %1442 = vperm.xlu0 %1441, %v329
    %v1443 = vpop.permute.xlu0 %1442
    %1445 = vset.pattern.permute.xlu0 9
    %1446 = vperm.xlu0 %1445, %v336
    %v1447 = vpop.permute.xlu0 %1446
    %v1449 = vperm.slane %v1432, 0
    %v1450 = vmul.f32 %v1435, %v1449
    %v1451 = vmul.f32 %v1439, %v1449
    %v1452 = vmul.f32 %v1443, %v1449
    %v1453 = vmul.f32 %v1447, %v1449
    %v1454 = vsub.f32 %v1410, %v1450
    %v1455 = vsub.f32 %v1417, %v1451
    %v1456 = vsub.f32 %v1424, %v1452
    %v1457 = vsub.f32 %v1431, %v1453
    %v1458 = vmul.f32 %v1454, %v1454
    %v1459 = vmul.f32 %v1455, %v1455
    %v1460 = vmul.f32 %v1456, %v1456
    %v1461 = vmul.f32 %v1457, %v1457
    %v1466 = vrot.slane %v1459, 7
    %v1467 = vsel %vm428, %v1466, %v1458
    %v1468 = vrot.slane %v1460, 6
    %v1469 = vsel %vm431, %v1468, %v1467
    %v1470 = vrot.slane %v1461, 5
    %v1471 = vsel %vm434, %v1470, %v1469
    %v1473 = vsel %vm437, %v1471, 0.0
    %1474 = vadd.xlane.f32.xlu0 %v1473
    %v1475 = vpop.xlane.xlu0 %1474
    %v1476 = vmax.f32 %v1475, 1e-24
    %v1477 = vrsqrt.pop %v1476
    %v1478 = vmul.f32 %v1477, %v1476
    %v1479 = vmul.f32 %v1478, %v1477
    %v1480 = vmul.f32 0.5, %v1479
    %v1481 = vsub.f32 1.5, %v1480
    %v1482 = vmul.f32 %v1477, %v1481
    %vm1483 = vweird.f32 %v1476
    %vm1484 = vweird.f32 %v1477
    %vm1485 = vmor %vm1483, %vm1484
    %v1486 = vsel %vm1485, %v1477, %v1482
    %v1488 = vrot.slane %v1486, 1
    %v1489 = vrot.slane %v1486, 2
    %v1490 = vrot.slane %v1486, 3
    %v1495 = vmul.f32 %v1454, %v1486
    %v1496 = vmul.f32 %v1455, %v1488
    %v1497 = vmul.f32 %v1456, %v1489
    %v1498 = vmul.f32 %v1457, %v1490
    %1499 = vset.pattern.permute.xlu0 10
    %1500 = vperm.xlu0 %1499, %v305
    %v1501 = vpop.permute.xlu0 %1500
    %1503 = vset.pattern.permute.xlu0 10
    %1504 = vperm.xlu0 %1503, %v306
    %v1505 = vpop.permute.xlu0 %1504
    %1507 = vset.pattern.permute.xlu0 10
    %1508 = vperm.xlu0 %1507, %v307
    %v1509 = vpop.permute.xlu0 %1508
    %1511 = vset.pattern.permute.xlu0 10
    %1512 = vperm.xlu0 %1511, %v308
    %v1513 = vpop.permute.xlu0 %1512
    %v1515 = vmul.f32 %v1501, %v109
    %v1516 = vmul.f32 %v1505, %v110
    %v1517 = vmul.f32 %v1509, %v111
    %v1518 = vmul.f32 %v1513, %v112
    %v1519 = vsel %vm52, %v1515, 0.0
    %v1520 = vrot.slane %v1519, 4
    %v1521 = vadd.f32 %v1519, %v1520
    %v1522 = vrot.slane %v1521, 2
    %v1523 = vadd.f32 %v1521, %v1522
    %v1524 = vrot.slane %v1523, 1
    %v1525 = vadd.f32 %v1523, %v1524
    %v1526 = vsel %vm52, %v1516, 0.0
    %v1527 = vrot.slane %v1526, 4
    %v1528 = vadd.f32 %v1526, %v1527
    %v1529 = vrot.slane %v1528, 2
    %v1530 = vadd.f32 %v1528, %v1529
    %v1531 = vrot.slane %v1530, 1
    %v1532 = vadd.f32 %v1530, %v1531
    %v1533 = vsel %vm52, %v1517, 0.0
    %v1534 = vrot.slane %v1533, 4
    %v1535 = vadd.f32 %v1533, %v1534
    %v1536 = vrot.slane %v1535, 2
    %v1537 = vadd.f32 %v1535, %v1536
    %v1538 = vrot.slane %v1537, 1
    %v1539 = vadd.f32 %v1537, %v1538
    %v1540 = vsel %vm52, %v1518, 0.0
    %v1541 = vrot.slane %v1540, 4
    %v1542 = vadd.f32 %v1540, %v1541
    %v1543 = vrot.slane %v1542, 2
    %v1544 = vadd.f32 %v1542, %v1543
    %v1545 = vrot.slane %v1544, 1
    %v1546 = vadd.f32 %v1544, %v1545
    %v1547 = vld [vmem:[%s6 + $0xa] sm:$0x1]
    %1548 = vset.pattern.permute.xlu0 10
    %1549 = vperm.xlu0 %1548, %v315
    %v1550 = vpop.permute.xlu0 %1549
    %1552 = vset.pattern.permute.xlu0 10
    %1553 = vperm.xlu0 %1552, %v322
    %v1554 = vpop.permute.xlu0 %1553
    %1556 = vset.pattern.permute.xlu0 10
    %1557 = vperm.xlu0 %1556, %v329
    %v1558 = vpop.permute.xlu0 %1557
    %1560 = vset.pattern.permute.xlu0 10
    %1561 = vperm.xlu0 %1560, %v336
    %v1562 = vpop.permute.xlu0 %1561
    %v1564 = vperm.slane %v1547, 0
    %v1565 = vmul.f32 %v1550, %v1564
    %v1566 = vmul.f32 %v1554, %v1564
    %v1567 = vmul.f32 %v1558, %v1564
    %v1568 = vmul.f32 %v1562, %v1564
    %v1569 = vsub.f32 %v1525, %v1565
    %v1570 = vsub.f32 %v1532, %v1566
    %v1571 = vsub.f32 %v1539, %v1567
    %v1572 = vsub.f32 %v1546, %v1568
    %v1573 = vmul.f32 %v1569, %v1569
    %v1574 = vmul.f32 %v1570, %v1570
    %v1575 = vmul.f32 %v1571, %v1571
    %v1576 = vmul.f32 %v1572, %v1572
    %v1581 = vrot.slane %v1574, 7
    %v1582 = vsel %vm428, %v1581, %v1573
    %v1583 = vrot.slane %v1575, 6
    %v1584 = vsel %vm431, %v1583, %v1582
    %v1585 = vrot.slane %v1576, 5
    %v1586 = vsel %vm434, %v1585, %v1584
    %v1588 = vsel %vm437, %v1586, 0.0
    %1589 = vadd.xlane.f32.xlu0 %v1588
    %v1590 = vpop.xlane.xlu0 %1589
    %v1591 = vmax.f32 %v1590, 1e-24
    %v1592 = vrsqrt.pop %v1591
    %v1593 = vmul.f32 %v1592, %v1591
    %v1594 = vmul.f32 %v1593, %v1592
    %v1595 = vmul.f32 0.5, %v1594
    %v1596 = vsub.f32 1.5, %v1595
    %v1597 = vmul.f32 %v1592, %v1596
    %vm1598 = vweird.f32 %v1591
    %vm1599 = vweird.f32 %v1592
    %vm1600 = vmor %vm1598, %vm1599
    %v1601 = vsel %vm1600, %v1592, %v1597
    %v1603 = vrot.slane %v1601, 1
    %v1604 = vrot.slane %v1601, 2
    %v1605 = vrot.slane %v1601, 3
    %v1610 = vmul.f32 %v1569, %v1601
    %v1611 = vmul.f32 %v1570, %v1603
    %v1612 = vmul.f32 %v1571, %v1604
    %v1613 = vmul.f32 %v1572, %v1605
    %1614 = vset.pattern.permute.xlu0 11
    %1615 = vperm.xlu0 %1614, %v305
    %v1616 = vpop.permute.xlu0 %1615
    %1618 = vset.pattern.permute.xlu0 11
    %1619 = vperm.xlu0 %1618, %v306
    %v1620 = vpop.permute.xlu0 %1619
    %1622 = vset.pattern.permute.xlu0 11
    %1623 = vperm.xlu0 %1622, %v307
    %v1624 = vpop.permute.xlu0 %1623
    %1626 = vset.pattern.permute.xlu0 11
    %1627 = vperm.xlu0 %1626, %v308
    %v1628 = vpop.permute.xlu0 %1627
    %v1630 = vmul.f32 %v1616, %v109
    %v1631 = vmul.f32 %v1620, %v110
    %v1632 = vmul.f32 %v1624, %v111
    %v1633 = vmul.f32 %v1628, %v112
    %v1634 = vsel %vm52, %v1630, 0.0
    %v1635 = vrot.slane %v1634, 4
    %v1636 = vadd.f32 %v1634, %v1635
    %v1637 = vrot.slane %v1636, 2
    %v1638 = vadd.f32 %v1636, %v1637
    %v1639 = vrot.slane %v1638, 1
    %v1640 = vadd.f32 %v1638, %v1639
    %v1641 = vsel %vm52, %v1631, 0.0
    %v1642 = vrot.slane %v1641, 4
    %v1643 = vadd.f32 %v1641, %v1642
    %v1644 = vrot.slane %v1643, 2
    %v1645 = vadd.f32 %v1643, %v1644
    %v1646 = vrot.slane %v1645, 1
    %v1647 = vadd.f32 %v1645, %v1646
    %v1648 = vsel %vm52, %v1632, 0.0
    %v1649 = vrot.slane %v1648, 4
    %v1650 = vadd.f32 %v1648, %v1649
    %v1651 = vrot.slane %v1650, 2
    %v1652 = vadd.f32 %v1650, %v1651
    %v1653 = vrot.slane %v1652, 1
    %v1654 = vadd.f32 %v1652, %v1653
    %v1655 = vsel %vm52, %v1633, 0.0
    %v1656 = vrot.slane %v1655, 4
    %v1657 = vadd.f32 %v1655, %v1656
    %v1658 = vrot.slane %v1657, 2
    %v1659 = vadd.f32 %v1657, %v1658
    %v1660 = vrot.slane %v1659, 1
    %v1661 = vadd.f32 %v1659, %v1660
    %v1662 = vld [vmem:[%s6 + $0xb] sm:$0x1]
    %1663 = vset.pattern.permute.xlu0 11
    %1664 = vperm.xlu0 %1663, %v315
    %v1665 = vpop.permute.xlu0 %1664
    %1667 = vset.pattern.permute.xlu0 11
    %1668 = vperm.xlu0 %1667, %v322
    %v1669 = vpop.permute.xlu0 %1668
    %1671 = vset.pattern.permute.xlu0 11
    %1672 = vperm.xlu0 %1671, %v329
    %v1673 = vpop.permute.xlu0 %1672
    %1675 = vset.pattern.permute.xlu0 11
    %1676 = vperm.xlu0 %1675, %v336
    %v1677 = vpop.permute.xlu0 %1676
    %v1679 = vperm.slane %v1662, 0
    %v1680 = vmul.f32 %v1665, %v1679
    %v1681 = vmul.f32 %v1669, %v1679
    %v1682 = vmul.f32 %v1673, %v1679
    %v1683 = vmul.f32 %v1677, %v1679
    %v1684 = vsub.f32 %v1640, %v1680
    %v1685 = vsub.f32 %v1647, %v1681
    %v1686 = vsub.f32 %v1654, %v1682
    %v1687 = vsub.f32 %v1661, %v1683
    %v1688 = vmul.f32 %v1684, %v1684
    %v1689 = vmul.f32 %v1685, %v1685
    %v1690 = vmul.f32 %v1686, %v1686
    %v1691 = vmul.f32 %v1687, %v1687
    %v1696 = vrot.slane %v1689, 7
    %v1697 = vsel %vm428, %v1696, %v1688
    %v1698 = vrot.slane %v1690, 6
    %v1699 = vsel %vm431, %v1698, %v1697
    %v1700 = vrot.slane %v1691, 5
    %v1701 = vsel %vm434, %v1700, %v1699
    %v1703 = vsel %vm437, %v1701, 0.0
    %1704 = vadd.xlane.f32.xlu0 %v1703
    %v1705 = vpop.xlane.xlu0 %1704
    %v1706 = vmax.f32 %v1705, 1e-24
    %v1707 = vrsqrt.pop %v1706
    %v1708 = vmul.f32 %v1707, %v1706
    %v1709 = vmul.f32 %v1708, %v1707
    %v1710 = vmul.f32 0.5, %v1709
    %v1711 = vsub.f32 1.5, %v1710
    %v1712 = vmul.f32 %v1707, %v1711
    %vm1713 = vweird.f32 %v1706
    %vm1714 = vweird.f32 %v1707
    %vm1715 = vmor %vm1713, %vm1714
    %v1716 = vsel %vm1715, %v1707, %v1712
    %v1718 = vrot.slane %v1716, 1
    %v1719 = vrot.slane %v1716, 2
    %v1720 = vrot.slane %v1716, 3
    %v1725 = vmul.f32 %v1684, %v1716
    %v1726 = vmul.f32 %v1685, %v1718
    %v1727 = vmul.f32 %v1686, %v1719
    %v1728 = vmul.f32 %v1687, %v1720
    %1729 = vset.pattern.permute.xlu0 12
    %1730 = vperm.xlu0 %1729, %v305
    %v1731 = vpop.permute.xlu0 %1730
    %1733 = vset.pattern.permute.xlu0 12
    %1734 = vperm.xlu0 %1733, %v306
    %v1735 = vpop.permute.xlu0 %1734
    %1737 = vset.pattern.permute.xlu0 12
    %1738 = vperm.xlu0 %1737, %v307
    %v1739 = vpop.permute.xlu0 %1738
    %1741 = vset.pattern.permute.xlu0 12
    %1742 = vperm.xlu0 %1741, %v308
    %v1743 = vpop.permute.xlu0 %1742
    %v1745 = vmul.f32 %v1731, %v109
    %v1746 = vmul.f32 %v1735, %v110
    %v1747 = vmul.f32 %v1739, %v111
    %v1748 = vmul.f32 %v1743, %v112
    %v1749 = vsel %vm52, %v1745, 0.0
    %v1750 = vrot.slane %v1749, 4
    %v1751 = vadd.f32 %v1749, %v1750
    %v1752 = vrot.slane %v1751, 2
    %v1753 = vadd.f32 %v1751, %v1752
    %v1754 = vrot.slane %v1753, 1
    %v1755 = vadd.f32 %v1753, %v1754
    %v1756 = vsel %vm52, %v1746, 0.0
    %v1757 = vrot.slane %v1756, 4
    %v1758 = vadd.f32 %v1756, %v1757
    %v1759 = vrot.slane %v1758, 2
    %v1760 = vadd.f32 %v1758, %v1759
    %v1761 = vrot.slane %v1760, 1
    %v1762 = vadd.f32 %v1760, %v1761
    %v1763 = vsel %vm52, %v1747, 0.0
    %v1764 = vrot.slane %v1763, 4
    %v1765 = vadd.f32 %v1763, %v1764
    %v1766 = vrot.slane %v1765, 2
    %v1767 = vadd.f32 %v1765, %v1766
    %v1768 = vrot.slane %v1767, 1
    %v1769 = vadd.f32 %v1767, %v1768
    %v1770 = vsel %vm52, %v1748, 0.0
    %v1771 = vrot.slane %v1770, 4
    %v1772 = vadd.f32 %v1770, %v1771
    %v1773 = vrot.slane %v1772, 2
    %v1774 = vadd.f32 %v1772, %v1773
    %v1775 = vrot.slane %v1774, 1
    %v1776 = vadd.f32 %v1774, %v1775
    %v1777 = vld [vmem:[%s6 + $0xc] sm:$0x1]
    %1778 = vset.pattern.permute.xlu0 12
    %1779 = vperm.xlu0 %1778, %v315
    %v1780 = vpop.permute.xlu0 %1779
    %1782 = vset.pattern.permute.xlu0 12
    %1783 = vperm.xlu0 %1782, %v322
    %v1784 = vpop.permute.xlu0 %1783
    %1786 = vset.pattern.permute.xlu0 12
    %1787 = vperm.xlu0 %1786, %v329
    %v1788 = vpop.permute.xlu0 %1787
    %1790 = vset.pattern.permute.xlu0 12
    %1791 = vperm.xlu0 %1790, %v336
    %v1792 = vpop.permute.xlu0 %1791
    %v1794 = vperm.slane %v1777, 0
    %v1795 = vmul.f32 %v1780, %v1794
    %v1796 = vmul.f32 %v1784, %v1794
    %v1797 = vmul.f32 %v1788, %v1794
    %v1798 = vmul.f32 %v1792, %v1794
    %v1799 = vsub.f32 %v1755, %v1795
    %v1800 = vsub.f32 %v1762, %v1796
    %v1801 = vsub.f32 %v1769, %v1797
    %v1802 = vsub.f32 %v1776, %v1798
    %v1803 = vmul.f32 %v1799, %v1799
    %v1804 = vmul.f32 %v1800, %v1800
    %v1805 = vmul.f32 %v1801, %v1801
    %v1806 = vmul.f32 %v1802, %v1802
    %v1811 = vrot.slane %v1804, 7
    %v1812 = vsel %vm428, %v1811, %v1803
    %v1813 = vrot.slane %v1805, 6
    %v1814 = vsel %vm431, %v1813, %v1812
    %v1815 = vrot.slane %v1806, 5
    %v1816 = vsel %vm434, %v1815, %v1814
    %v1818 = vsel %vm437, %v1816, 0.0
    %1819 = vadd.xlane.f32.xlu0 %v1818
    %v1820 = vpop.xlane.xlu0 %1819
    %v1821 = vmax.f32 %v1820, 1e-24
    %v1822 = vrsqrt.pop %v1821
    %v1823 = vmul.f32 %v1822, %v1821
    %v1824 = vmul.f32 %v1823, %v1822
    %v1825 = vmul.f32 0.5, %v1824
    %v1826 = vsub.f32 1.5, %v1825
    %v1827 = vmul.f32 %v1822, %v1826
    %vm1828 = vweird.f32 %v1821
    %vm1829 = vweird.f32 %v1822
    %vm1830 = vmor %vm1828, %vm1829
    %v1831 = vsel %vm1830, %v1822, %v1827
    %v1833 = vrot.slane %v1831, 1
    %v1834 = vrot.slane %v1831, 2
    %v1835 = vrot.slane %v1831, 3
    %v1840 = vmul.f32 %v1799, %v1831
    %v1841 = vmul.f32 %v1800, %v1833
    %v1842 = vmul.f32 %v1801, %v1834
    %v1843 = vmul.f32 %v1802, %v1835
    %1844 = vset.pattern.permute.xlu0 13
    %1845 = vperm.xlu0 %1844, %v305
    %v1846 = vpop.permute.xlu0 %1845
    %1848 = vset.pattern.permute.xlu0 13
    %1849 = vperm.xlu0 %1848, %v306
    %v1850 = vpop.permute.xlu0 %1849
    %1852 = vset.pattern.permute.xlu0 13
    %1853 = vperm.xlu0 %1852, %v307
    %v1854 = vpop.permute.xlu0 %1853
    %1856 = vset.pattern.permute.xlu0 13
    %1857 = vperm.xlu0 %1856, %v308
    %v1858 = vpop.permute.xlu0 %1857
    %v1860 = vmul.f32 %v1846, %v109
    %v1861 = vmul.f32 %v1850, %v110
    %v1862 = vmul.f32 %v1854, %v111
    %v1863 = vmul.f32 %v1858, %v112
    %v1864 = vsel %vm52, %v1860, 0.0
    %v1865 = vrot.slane %v1864, 4
    %v1866 = vadd.f32 %v1864, %v1865
    %v1867 = vrot.slane %v1866, 2
    %v1868 = vadd.f32 %v1866, %v1867
    %v1869 = vrot.slane %v1868, 1
    %v1870 = vadd.f32 %v1868, %v1869
    %v1871 = vsel %vm52, %v1861, 0.0
    %v1872 = vrot.slane %v1871, 4
    %v1873 = vadd.f32 %v1871, %v1872
    %v1874 = vrot.slane %v1873, 2
    %v1875 = vadd.f32 %v1873, %v1874
    %v1876 = vrot.slane %v1875, 1
    %v1877 = vadd.f32 %v1875, %v1876
    %v1878 = vsel %vm52, %v1862, 0.0
    %v1879 = vrot.slane %v1878, 4
    %v1880 = vadd.f32 %v1878, %v1879
    %v1881 = vrot.slane %v1880, 2
    %v1882 = vadd.f32 %v1880, %v1881
    %v1883 = vrot.slane %v1882, 1
    %v1884 = vadd.f32 %v1882, %v1883
    %v1885 = vsel %vm52, %v1863, 0.0
    %v1886 = vrot.slane %v1885, 4
    %v1887 = vadd.f32 %v1885, %v1886
    %v1888 = vrot.slane %v1887, 2
    %v1889 = vadd.f32 %v1887, %v1888
    %v1890 = vrot.slane %v1889, 1
    %v1891 = vadd.f32 %v1889, %v1890
    %v1892 = vld [vmem:[%s6 + $0xd] sm:$0x1]
    %1893 = vset.pattern.permute.xlu0 13
    %1894 = vperm.xlu0 %1893, %v315
    %v1895 = vpop.permute.xlu0 %1894
    %1897 = vset.pattern.permute.xlu0 13
    %1898 = vperm.xlu0 %1897, %v322
    %v1899 = vpop.permute.xlu0 %1898
    %1901 = vset.pattern.permute.xlu0 13
    %1902 = vperm.xlu0 %1901, %v329
    %v1903 = vpop.permute.xlu0 %1902
    %1905 = vset.pattern.permute.xlu0 13
    %1906 = vperm.xlu0 %1905, %v336
    %v1907 = vpop.permute.xlu0 %1906
    %v1909 = vperm.slane %v1892, 0
    %v1910 = vmul.f32 %v1895, %v1909
    %v1911 = vmul.f32 %v1899, %v1909
    %v1912 = vmul.f32 %v1903, %v1909
    %v1913 = vmul.f32 %v1907, %v1909
    %v1914 = vsub.f32 %v1870, %v1910
    %v1915 = vsub.f32 %v1877, %v1911
    %v1916 = vsub.f32 %v1884, %v1912
    %v1917 = vsub.f32 %v1891, %v1913
    %v1918 = vmul.f32 %v1914, %v1914
    %v1919 = vmul.f32 %v1915, %v1915
    %v1920 = vmul.f32 %v1916, %v1916
    %v1921 = vmul.f32 %v1917, %v1917
    %v1926 = vrot.slane %v1919, 7
    %v1927 = vsel %vm428, %v1926, %v1918
    %v1928 = vrot.slane %v1920, 6
    %v1929 = vsel %vm431, %v1928, %v1927
    %v1930 = vrot.slane %v1921, 5
    %v1931 = vsel %vm434, %v1930, %v1929
    %v1933 = vsel %vm437, %v1931, 0.0
    %1934 = vadd.xlane.f32.xlu0 %v1933
    %v1935 = vpop.xlane.xlu0 %1934
    %v1936 = vmax.f32 %v1935, 1e-24
    %v1937 = vrsqrt.pop %v1936
    %v1938 = vmul.f32 %v1937, %v1936
    %v1939 = vmul.f32 %v1938, %v1937
    %v1940 = vmul.f32 0.5, %v1939
    %v1941 = vsub.f32 1.5, %v1940
    %v1942 = vmul.f32 %v1937, %v1941
    %vm1943 = vweird.f32 %v1936
    %vm1944 = vweird.f32 %v1937
    %vm1945 = vmor %vm1943, %vm1944
    %v1946 = vsel %vm1945, %v1937, %v1942
    %v1948 = vrot.slane %v1946, 1
    %v1949 = vrot.slane %v1946, 2
    %v1950 = vrot.slane %v1946, 3
    %v1955 = vmul.f32 %v1914, %v1946
    %v1956 = vmul.f32 %v1915, %v1948
    %v1957 = vmul.f32 %v1916, %v1949
    %v1958 = vmul.f32 %v1917, %v1950
    %1959 = vset.pattern.permute.xlu0 14
    %1960 = vperm.xlu0 %1959, %v305
    %v1961 = vpop.permute.xlu0 %1960
    %1963 = vset.pattern.permute.xlu0 14
    %1964 = vperm.xlu0 %1963, %v306
    %v1965 = vpop.permute.xlu0 %1964
    %1967 = vset.pattern.permute.xlu0 14
    %1968 = vperm.xlu0 %1967, %v307
    %v1969 = vpop.permute.xlu0 %1968
    %1971 = vset.pattern.permute.xlu0 14
    %1972 = vperm.xlu0 %1971, %v308
    %v1973 = vpop.permute.xlu0 %1972
    %v1975 = vmul.f32 %v1961, %v109
    %v1976 = vmul.f32 %v1965, %v110
    %v1977 = vmul.f32 %v1969, %v111
    %v1978 = vmul.f32 %v1973, %v112
    %v1979 = vsel %vm52, %v1975, 0.0
    %v1980 = vrot.slane %v1979, 4
    %v1981 = vadd.f32 %v1979, %v1980
    %v1982 = vrot.slane %v1981, 2
    %v1983 = vadd.f32 %v1981, %v1982
    %v1984 = vrot.slane %v1983, 1
    %v1985 = vadd.f32 %v1983, %v1984
    %v1986 = vsel %vm52, %v1976, 0.0
    %v1987 = vrot.slane %v1986, 4
    %v1988 = vadd.f32 %v1986, %v1987
    %v1989 = vrot.slane %v1988, 2
    %v1990 = vadd.f32 %v1988, %v1989
    %v1991 = vrot.slane %v1990, 1
    %v1992 = vadd.f32 %v1990, %v1991
    %v1993 = vsel %vm52, %v1977, 0.0
    %v1994 = vrot.slane %v1993, 4
    %v1995 = vadd.f32 %v1993, %v1994
    %v1996 = vrot.slane %v1995, 2
    %v1997 = vadd.f32 %v1995, %v1996
    %v1998 = vrot.slane %v1997, 1
    %v1999 = vadd.f32 %v1997, %v1998
    %v2000 = vsel %vm52, %v1978, 0.0
    %v2001 = vrot.slane %v2000, 4
    %v2002 = vadd.f32 %v2000, %v2001
    %v2003 = vrot.slane %v2002, 2
    %v2004 = vadd.f32 %v2002, %v2003
    %v2005 = vrot.slane %v2004, 1
    %v2006 = vadd.f32 %v2004, %v2005
    %v2007 = vld [vmem:[%s6 + $0xe] sm:$0x1]
    %2008 = vset.pattern.permute.xlu0 14
    %2009 = vperm.xlu0 %2008, %v315
    %v2010 = vpop.permute.xlu0 %2009
    %2012 = vset.pattern.permute.xlu0 14
    %2013 = vperm.xlu0 %2012, %v322
    %v2014 = vpop.permute.xlu0 %2013
    %2016 = vset.pattern.permute.xlu0 14
    %2017 = vperm.xlu0 %2016, %v329
    %v2018 = vpop.permute.xlu0 %2017
    %2020 = vset.pattern.permute.xlu0 14
    %2021 = vperm.xlu0 %2020, %v336
    %v2022 = vpop.permute.xlu0 %2021
    %v2024 = vperm.slane %v2007, 0
    %v2025 = vmul.f32 %v2010, %v2024
    %v2026 = vmul.f32 %v2014, %v2024
    %v2027 = vmul.f32 %v2018, %v2024
    %v2028 = vmul.f32 %v2022, %v2024
    %v2029 = vsub.f32 %v1985, %v2025
    %v2030 = vsub.f32 %v1992, %v2026
    %v2031 = vsub.f32 %v1999, %v2027
    %v2032 = vsub.f32 %v2006, %v2028
    %v2033 = vmul.f32 %v2029, %v2029
    %v2034 = vmul.f32 %v2030, %v2030
    %v2035 = vmul.f32 %v2031, %v2031
    %v2036 = vmul.f32 %v2032, %v2032
    %v2041 = vrot.slane %v2034, 7
    %v2042 = vsel %vm428, %v2041, %v2033
    %v2043 = vrot.slane %v2035, 6
    %v2044 = vsel %vm431, %v2043, %v2042
    %v2045 = vrot.slane %v2036, 5
    %v2046 = vsel %vm434, %v2045, %v2044
    %v2048 = vsel %vm437, %v2046, 0.0
    %2049 = vadd.xlane.f32.xlu0 %v2048
    %v2050 = vpop.xlane.xlu0 %2049
    %v2051 = vmax.f32 %v2050, 1e-24
    %v2052 = vrsqrt.pop %v2051
    %v2053 = vmul.f32 %v2052, %v2051
    %v2054 = vmul.f32 %v2053, %v2052
    %v2055 = vmul.f32 0.5, %v2054
    %v2056 = vsub.f32 1.5, %v2055
    %v2057 = vmul.f32 %v2052, %v2056
    %vm2058 = vweird.f32 %v2051
    %vm2059 = vweird.f32 %v2052
    %vm2060 = vmor %vm2058, %vm2059
    %v2061 = vsel %vm2060, %v2052, %v2057
    %v2063 = vrot.slane %v2061, 1
    %v2064 = vrot.slane %v2061, 2
    %v2065 = vrot.slane %v2061, 3
    %v2070 = vmul.f32 %v2029, %v2061
    %v2071 = vmul.f32 %v2030, %v2063
    %v2072 = vmul.f32 %v2031, %v2064
    %v2073 = vmul.f32 %v2032, %v2065
    %2074 = vset.pattern.permute.xlu0 15
    %2075 = vperm.xlu0 %2074, %v305
    %v2076 = vpop.permute.xlu0 %2075
    %2078 = vset.pattern.permute.xlu0 15
    %2079 = vperm.xlu0 %2078, %v306
    %v2080 = vpop.permute.xlu0 %2079
    %2082 = vset.pattern.permute.xlu0 15
    %2083 = vperm.xlu0 %2082, %v307
    %v2084 = vpop.permute.xlu0 %2083
    %2086 = vset.pattern.permute.xlu0 15
    %2087 = vperm.xlu0 %2086, %v308
    %v2088 = vpop.permute.xlu0 %2087
    %v2090 = vmul.f32 %v2076, %v109
    %v2091 = vmul.f32 %v2080, %v110
    %v2092 = vmul.f32 %v2084, %v111
    %v2093 = vmul.f32 %v2088, %v112
    %v2094 = vsel %vm52, %v2090, 0.0
    %v2095 = vrot.slane %v2094, 4
    %v2096 = vadd.f32 %v2094, %v2095
    %v2097 = vrot.slane %v2096, 2
    %v2098 = vadd.f32 %v2096, %v2097
    %v2099 = vrot.slane %v2098, 1
    %v2100 = vadd.f32 %v2098, %v2099
    %v2101 = vsel %vm52, %v2091, 0.0
    %v2102 = vrot.slane %v2101, 4
    %v2103 = vadd.f32 %v2101, %v2102
    %v2104 = vrot.slane %v2103, 2
    %v2105 = vadd.f32 %v2103, %v2104
    %v2106 = vrot.slane %v2105, 1
    %v2107 = vadd.f32 %v2105, %v2106
    %v2108 = vsel %vm52, %v2092, 0.0
    %v2109 = vrot.slane %v2108, 4
    %v2110 = vadd.f32 %v2108, %v2109
    %v2111 = vrot.slane %v2110, 2
    %v2112 = vadd.f32 %v2110, %v2111
    %v2113 = vrot.slane %v2112, 1
    %v2114 = vadd.f32 %v2112, %v2113
    %v2115 = vsel %vm52, %v2093, 0.0
    %v2116 = vrot.slane %v2115, 4
    %v2117 = vadd.f32 %v2115, %v2116
    %v2118 = vrot.slane %v2117, 2
    %v2119 = vadd.f32 %v2117, %v2118
    %v2120 = vrot.slane %v2119, 1
    %v2121 = vadd.f32 %v2119, %v2120
    %v2122 = vld [vmem:[%s6 + $0xf] sm:$0x1]
    %2123 = vset.pattern.permute.xlu0 15
    %2124 = vperm.xlu0 %2123, %v315
    %v2125 = vpop.permute.xlu0 %2124
    %2127 = vset.pattern.permute.xlu0 15
    %2128 = vperm.xlu0 %2127, %v322
    %v2129 = vpop.permute.xlu0 %2128
    %2131 = vset.pattern.permute.xlu0 15
    %2132 = vperm.xlu0 %2131, %v329
    %v2133 = vpop.permute.xlu0 %2132
    %2135 = vset.pattern.permute.xlu0 15
    %2136 = vperm.xlu0 %2135, %v336
    %v2137 = vpop.permute.xlu0 %2136
    %v2139 = vperm.slane %v2122, 0
    %v2140 = vmul.f32 %v2125, %v2139
    %v2141 = vmul.f32 %v2129, %v2139
    %v2142 = vmul.f32 %v2133, %v2139
    %v2143 = vmul.f32 %v2137, %v2139
    %v2144 = vsub.f32 %v2100, %v2140
    %v2145 = vsub.f32 %v2107, %v2141
    %v2146 = vsub.f32 %v2114, %v2142
    %v2147 = vsub.f32 %v2121, %v2143
    %v2148 = vmul.f32 %v2144, %v2144
    %v2149 = vmul.f32 %v2145, %v2145
    %v2150 = vmul.f32 %v2146, %v2146
    %v2151 = vmul.f32 %v2147, %v2147
    %v2156 = vrot.slane %v2149, 7
    %v2157 = vsel %vm428, %v2156, %v2148
    %v2158 = vrot.slane %v2150, 6
    %v2159 = vsel %vm431, %v2158, %v2157
    %v2160 = vrot.slane %v2151, 5
    %v2161 = vsel %vm434, %v2160, %v2159
    %v2163 = vsel %vm437, %v2161, 0.0
    %2164 = vadd.xlane.f32.xlu0 %v2163
    %v2165 = vpop.xlane.xlu0 %2164
    %v2166 = vmax.f32 %v2165, 1e-24
    %v2167 = vrsqrt.pop %v2166
    %v2168 = vmul.f32 %v2167, %v2166
    %v2169 = vmul.f32 %v2168, %v2167
    %v2170 = vmul.f32 0.5, %v2169
    %v2171 = vsub.f32 1.5, %v2170
    %v2172 = vmul.f32 %v2167, %v2171
    %vm2173 = vweird.f32 %v2166
    %vm2174 = vweird.f32 %v2167
    %vm2175 = vmor %vm2173, %vm2174
    %v2176 = vsel %vm2175, %v2167, %v2172
    %v2178 = vrot.slane %v2176, 1
    %v2179 = vrot.slane %v2176, 2
    %v2180 = vrot.slane %v2176, 3
    %v2185 = vmul.f32 %v2144, %v2176
    %v2186 = vmul.f32 %v2145, %v2178
    %v2187 = vmul.f32 %v2146, %v2179
    %v2188 = vmul.f32 %v2147, %v2180
    %v2193 = vrot.slane %v461, 7
    %v2194 = vsel %vm428, %v2193, %v460
    %v2195 = vrot.slane %v462, 6
    %v2196 = vsel %vm431, %v2195, %v2194
    %v2197 = vrot.slane %v463, 5
    %v2198 = vsel %vm434, %v2197, %v2196
    %v2204 = vrot.slane %v576, 7
    %v2205 = vsel %vm428, %v2204, %v575
    %v2206 = vrot.slane %v577, 6
    %v2207 = vsel %vm431, %v2206, %v2205
    %v2208 = vrot.slane %v578, 5
    %v2209 = vsel %vm434, %v2208, %v2207
    %2210 = vrot.lane.b32.xlu0 %v2209, 32
    %v2211 = vpop.permute.xlu0 %2210
    %v2217 = vrot.slane %v691, 7
    %v2218 = vsel %vm428, %v2217, %v690
    %v2219 = vrot.slane %v692, 6
    %v2220 = vsel %vm431, %v2219, %v2218
    %v2221 = vrot.slane %v693, 5
    %v2222 = vsel %vm434, %v2221, %v2220
    %2223 = vrot.lane.b32.xlu0 %v2222, 64
    %v2224 = vpop.permute.xlu0 %2223
    %v2230 = vrot.slane %v806, 7
    %v2231 = vsel %vm428, %v2230, %v805
    %v2232 = vrot.slane %v807, 6
    %v2233 = vsel %vm431, %v2232, %v2231
    %v2234 = vrot.slane %v808, 5
    %v2235 = vsel %vm434, %v2234, %v2233
    %2236 = vrot.lane.b32.xlu0 %v2235, 96
    %v2237 = vpop.permute.xlu0 %2236
    %v2243 = vrot.slane %v921, 7
    %v2244 = vsel %vm428, %v2243, %v920
    %v2245 = vrot.slane %v922, 6
    %v2246 = vsel %vm431, %v2245, %v2244
    %v2247 = vrot.slane %v923, 5
    %v2248 = vsel %vm434, %v2247, %v2246
    %v2254 = vrot.slane %v1036, 7
    %v2255 = vsel %vm428, %v2254, %v1035
    %v2256 = vrot.slane %v1037, 6
    %v2257 = vsel %vm431, %v2256, %v2255
    %v2258 = vrot.slane %v1038, 5
    %v2259 = vsel %vm434, %v2258, %v2257
    %2260 = vrot.lane.b32.xlu0 %v2259, 32
    %v2261 = vpop.permute.xlu0 %2260
    %v2267 = vrot.slane %v1151, 7
    %v2268 = vsel %vm428, %v2267, %v1150
    %v2269 = vrot.slane %v1152, 6
    %v2270 = vsel %vm431, %v2269, %v2268
    %v2271 = vrot.slane %v1153, 5
    %v2272 = vsel %vm434, %v2271, %v2270
    %2273 = vrot.lane.b32.xlu0 %v2272, 64
    %v2274 = vpop.permute.xlu0 %2273
    %v2280 = vrot.slane %v1266, 7
    %v2281 = vsel %vm428, %v2280, %v1265
    %v2282 = vrot.slane %v1267, 6
    %v2283 = vsel %vm431, %v2282, %v2281
    %v2284 = vrot.slane %v1268, 5
    %v2285 = vsel %vm434, %v2284, %v2283
    %2286 = vrot.lane.b32.xlu0 %v2285, 96
    %v2287 = vpop.permute.xlu0 %2286
    %v2293 = vrot.slane %v1381, 7
    %v2294 = vsel %vm428, %v2293, %v1380
    %v2295 = vrot.slane %v1382, 6
    %v2296 = vsel %vm431, %v2295, %v2294
    %v2297 = vrot.slane %v1383, 5
    %v2298 = vsel %vm434, %v2297, %v2296
    %v2304 = vrot.slane %v1496, 7
    %v2305 = vsel %vm428, %v2304, %v1495
    %v2306 = vrot.slane %v1497, 6
    %v2307 = vsel %vm431, %v2306, %v2305
    %v2308 = vrot.slane %v1498, 5
    %v2309 = vsel %vm434, %v2308, %v2307
    %2310 = vrot.lane.b32.xlu0 %v2309, 32
    %v2311 = vpop.permute.xlu0 %2310
    %v2317 = vrot.slane %v1611, 7
    %v2318 = vsel %vm428, %v2317, %v1610
    %v2319 = vrot.slane %v1612, 6
    %v2320 = vsel %vm431, %v2319, %v2318
    %v2321 = vrot.slane %v1613, 5
    %v2322 = vsel %vm434, %v2321, %v2320
    %2323 = vrot.lane.b32.xlu0 %v2322, 64
    %v2324 = vpop.permute.xlu0 %2323
    %v2330 = vrot.slane %v1726, 7
    %v2331 = vsel %vm428, %v2330, %v1725
    %v2332 = vrot.slane %v1727, 6
    %v2333 = vsel %vm431, %v2332, %v2331
    %v2334 = vrot.slane %v1728, 5
    %v2335 = vsel %vm434, %v2334, %v2333
    %2336 = vrot.lane.b32.xlu0 %v2335, 96
    %v2337 = vpop.permute.xlu0 %2336
    %v2343 = vrot.slane %v1841, 7
    %v2344 = vsel %vm428, %v2343, %v1840
    %v2345 = vrot.slane %v1842, 6
    %v2346 = vsel %vm431, %v2345, %v2344
    %v2347 = vrot.slane %v1843, 5
    %v2348 = vsel %vm434, %v2347, %v2346
    %v2354 = vrot.slane %v1956, 7
    %v2355 = vsel %vm428, %v2354, %v1955
    %v2356 = vrot.slane %v1957, 6
    %v2357 = vsel %vm431, %v2356, %v2355
    %v2358 = vrot.slane %v1958, 5
    %v2359 = vsel %vm434, %v2358, %v2357
    %2360 = vrot.lane.b32.xlu0 %v2359, 32
    %v2361 = vpop.permute.xlu0 %2360
    %v2367 = vrot.slane %v2071, 7
    %v2368 = vsel %vm428, %v2367, %v2070
    %v2369 = vrot.slane %v2072, 6
    %v2370 = vsel %vm431, %v2369, %v2368
    %v2371 = vrot.slane %v2073, 5
    %v2372 = vsel %vm434, %v2371, %v2370
    %2373 = vrot.lane.b32.xlu0 %v2372, 64
    %v2374 = vpop.permute.xlu0 %2373
    %v2380 = vrot.slane %v2186, 7
    %v2381 = vsel %vm428, %v2380, %v2185
    %v2382 = vrot.slane %v2187, 6
    %v2383 = vsel %vm431, %v2382, %v2381
    %v2384 = vrot.slane %v2188, 5
    %v2385 = vsel %vm434, %v2384, %v2383
    %2386 = vrot.lane.b32.xlu0 %v2385, 96
    %v2387 = vpop.permute.xlu0 %2386
    %v2389 = vsel %vm52, %v2198, %v2211
    %vm2390 = vcmask 523264
    %v2391 = vsel %vm2390, %v2389, %v2224
    %vm2392 = vcmask 785408
    %v2393 = vsel %vm2392, %v2391, %v2237
    %v2394 = vsel %vm52, %v2248, %v2261
    %v2395 = vsel %vm2390, %v2394, %v2274
    %v2396 = vsel %vm2392, %v2395, %v2287
    %v2397 = vsel %vm52, %v2298, %v2311
    %v2398 = vsel %vm2390, %v2397, %v2324
    %v2399 = vsel %vm2392, %v2398, %v2337
    %v2400 = vsel %vm52, %v2348, %v2361
    %v2401 = vsel %vm2390, %v2400, %v2374
    %v2402 = vsel %vm2392, %v2401, %v2387
    %v2403 = vmul.f32 %v2393, %v2393
    %v2404 = vmul.f32 %v2396, %v2396
    %v2405 = vmul.f32 %v2399, %v2399
    %v2406 = vmul.f32 %v2402, %v2402
    %vm2407 = vcmask 1043456
    %v2408 = vsel %vm2407, %v2403, 0.0
    %v2409 = vsel %vm2407, %v2404, 0.0
    %v2410 = vadd.f32 %v2408, %v2409
    %v2411 = vsel %vm2407, %v2405, 0.0
    %v2412 = vadd.f32 %v2410, %v2411
    %v2413 = vsel %vm2407, %v2406, 0.0
    %v2414 = vadd.f32 %v2412, %v2413
    %2415 = vadd.xlane.f32.xlu0 %v2414
    %v2416 = vpop.xlane.xlu0 %2415
    %v2417 = vmax.f32 %v2416, 1e-24
    %v2418 = vrsqrt.pop %v2417
    %v2419 = vmul.f32 %v2418, %v2417
    %v2420 = vmul.f32 %v2419, %v2418
    %v2421 = vmul.f32 0.5, %v2420
    %v2422 = vsub.f32 1.5, %v2421
    %v2423 = vmul.f32 %v2418, %v2422
    %vm2424 = vweird.f32 %v2417
    %vm2425 = vweird.f32 %v2418
    %vm2426 = vmor %vm2424, %vm2425
    %v2427 = vsel %vm2426, %v2418, %v2423
    %v2428 = vmul.f32 %v2393, %v2427
    %v2429 = vmul.f32 %v2396, %v2427
    %v2430 = vmul.f32 %v2399, %v2427
    %v2431 = vmul.f32 %v2402, %v2427
    %v2436 = vrot.slane %v2429, 4
    %v2437 = vrot.slane %v2431, 4
    %v2438 = vsel %vm2407, %v2428, %v2436
    %v2439 = vsel %vm2407, %v2430, %v2437
    %2442 = vst [vmem:[#allocation5] sm:$0xff] %v2438
    %2443 = vst [vmem:[#allocation5 + $0x8] sm:$0xff] %v2439
    // Predicated region
    $region34: #{tpu_custom_call.1} parent=1 // pred_check
      _
    $region35: #{tpu_custom_call.1} parent=1 // pred_check_branch
      %2445 = sbr.rel (0) target = $region37
    $region36: #{tpu_custom_call.1} parent=1 // pred_region
      %2447 = vsyncadd [#allocation4], 0
      %s2449 = sshll.u32 [#allocation5], 4
      %s2450 = int_to_ptr.vmem [resolvable:$true] %s2449
      %s2451 = sshll.u32 %s7, 4
      %s2452 = int_to_ptr.hbm [resolvable:$true] %s2451
      %2454 = dma.vmem_to_hbm [thread:$0]  %s2450, 256, %s2452, [#allocation4]
    $region37: #{tpu_custom_call.1} parent=1 // pred_fallthru
      _
    // Predicated region
    $region38: #{tpu_custom_call.1} parent=1 // pred_check
      _
    $region39: #{tpu_custom_call.1} parent=1 // pred_check_branch
      %2456 = sbr.rel (0) target = $region41
    $region40: #{tpu_custom_call.1} parent=1 // pred_region
      %2458 = dma.done [#allocation4], 256
    $region41: #{tpu_custom_call.1} parent=1 // pred_fallthru
      _
    %2459 = vsyncpa [#allocation3], 1
    %2460 = vsyncpa [#allocation4], 1

</llo_original>
